<compile_context>
chip_gen: v6e
topology: v6e:2x2x1
jax: 0.10.0
libtpu: 0.0.40
codegen_flags: <defaults>
</compile_context>

<pallas_src>
import numpy as np
import jax
import jax.numpy as jnp
from jax import lax
from jax.experimental import pallas as pl
from jax.experimental.pallas import tpu as pltpu

_BN_EPS = 1e-5
_LANE = 128
_SUB = 8


# ----------------------------------------------------------------------------
# helpers (python glue, computed once per config)
# ----------------------------------------------------------------------------
def _same_pad(in_dim, stride, kernel_size):
    out_dim = (in_dim + stride - 1) // stride
    pad = max(0, (out_dim - 1) * stride + kernel_size - in_dim)
    return out_dim, pad, pad // 2


def _round_up(x, m):
    return ((x + m - 1) // m) * m


def _full_spec(shape):
    n = len(shape)
    return pl.BlockSpec(shape, lambda b, n=n: (0,) * n)


def _choose_bb(B, per_row_bytes, budget_bytes):
    """Rows per grid step: amortize per-step overhead and MXU weight pushes while
    keeping >= 4 grid steps when possible (>= 2 per TensorCore on v7x) and
    staying inside the per-step VMEM budget."""
    for min_steps in (4, 2, 1):
        for bb in range(B, 0, -1):
            if B % bb or B // bb < min_steps:
                continue
            if bb * per_row_bytes <= budget_bytes:
                return bb
    return 1


# ----------------------------------------------------------------------------
# Pallas kernel
# ----------------------------------------------------------------------------
def _make_kernel(*, is_first_block, K, Bb, Co, L_out, Lp, pl2, W2,
                 conv1_qr, pool_qr, mxu_dtype):
    """conv1_qr / pool_qr: per-tap (phase-plane column offset q, phase index r)."""

    def kernel(xph_ref, mask_ref, bn1s_ref, bn1h_ref, w1f_ref,
               bn2s_ref, bn2h_ref, w2f_ref, b2_ref, o_ref,
               im_ref, h2p_ref):
        # ---- conv1 im2col: BN1 + ReLU (+ L-pad mask) fused into each tap copy.
        #      dropout1 = identity (eval mode).  Every tap is a contiguous lane
        #      slice of one stride-phase plane of the zero-padded input; tap row
        #      blocks start at 8-aligned sublane offsets (Co % 8 == 0).
        for i in range(Bb):
            for k in range(K):
                q, r = conv1_qr[k]
                xs = xph_ref[i, r, :, q:q + Lp]                       # (Co, Lp) f32
                if is_first_block:
                    tap = xs
                else:
                    tap = jnp.maximum(xs * bn1s_ref[...] + bn1h_ref[...], 0.0)
                    tap = tap * mask_ref[r, :, q:q + Lp]              # pad cols -> 0
                im_ref[k * Co:(k + 1) * Co, i * Lp:(i + 1) * Lp] = tap.astype(mxu_dtype)

        # ---- conv1 (stride s): ONE matmul covering all Bb batch rows
        acc1 = jnp.dot(w1f_ref[...], im_ref[...],
                       preferred_element_type=jnp.float32)            # (Co, Bb*Lp)

        # ---- BN2 (conv1 bias folded into the shift) + ReLU; dropout2 = identity
        h2 = jnp.maximum(acc1 * bn2s_ref[...] + bn2h_ref[...], 0.0)

        # ---- conv2 "same" padding: zero only the halo columns (not the whole
        #      plane), then store the real L_out columns once per row.
        for i in range(Bb):
            if pl2 > 0:
                h2p_ref[i, :, 0:pl2] = jnp.zeros((Co, pl2), jnp.float32)
            if W2 - pl2 - L_out > 0:
                h2p_ref[i, :, pl2 + L_out:] = jnp.zeros((Co, W2 - pl2 - L_out),
                                                        jnp.float32)
            h2p_ref[i, :, pl2:pl2 + L_out] = h2[:, i * Lp:i * Lp + L_out]

        # ---- conv2 (stride 1): im2col re-uses im_ref, ONE matmul for Bb rows
        for i in range(Bb):
            for k in range(K):
                im_ref[k * Co:(k + 1) * Co, i * Lp:(i + 1) * Lp] = \
                    h2p_ref[i, :, k:k + Lp].astype(mxu_dtype)
        acc2 = jnp.dot(w2f_ref[...], im_ref[...],
                       preferred_element_type=jnp.float32)
        res = acc2 + b2_ref[...]

        # ---- shortcut: MaxPool1dPadSame(k=s) = VPU max over stride-phase slices
        #      of the raw zero-padded input (zero pad joins the max).  The channel
        #      embedding was done in the wrapper, so this is already full width
        #      -> one unmasked (Co, Lp) store per batch row.
        for i in range(Bb):
            q, r = pool_qr[0]
            sc = xph_ref[i, r, :, q:q + Lp]
            for j in range(1, len(pool_qr)):
                q, r = pool_qr[j]
                sc = jnp.maximum(sc, xph_ref[i, r, :, q:q + Lp])
            o_ref[i] = (res[:, i * Lp:(i + 1) * Lp] + sc).astype(o_ref.dtype)

    return kernel


# ----------------------------------------------------------------------------
# wrapper
# ----------------------------------------------------------------------------
def residual_block_pallas(x, params, *, out_channels, kernel_size, downsample,
                          stride, groups=1, is_first_block=False,
                          mxu_dtype=jnp.float32):
    assert groups == 1, "only groups == 1 supported"
    B, C_in, L = x.shape
    C_out, K = out_channels, kernel_size
    assert C_out >= C_in, "channel zero-padding of the shortcut needs C_out >= C_in"
    s = stride if downsample else 1            # conv1 stride == maxpool kernel size

    # same-padding geometry
    L_out, pad1, pl1 = _same_pad(L, s, K)      # conv1
    _, pad2, pl2 = _same_pad(L_out, 1, K)      # conv2 (stride 1)
    _, padp, plp = _same_pad(L, 1, s)          # maxpool (stride=1 pad formula)

    Lp = _round_up(L_out, _LANE)               # lane-dense output width
    Co = _round_up(C_out, _SUB)                # sublane-dense channel width
    ch1 = (C_out - C_in) // 2                  # shortcut channel offset

    # stride-phase decomposition: every tap / pool window becomes a contiguous
    # slice of one of the s phase planes of the zero-padded input.
    conv_offs = [k - pl1 for k in range(K)]
    pool_offs = [j - plp for j in range(s)]
    all_offs = conv_offs + pool_offs
    P_L = -min(0, min(all_offs))
    off_max = max(all_offs)
    Lpad = max((Lp - 1) * s + off_max + P_L + 1, P_L + L)
    Lpad = _round_up(Lpad, s)
    M = Lpad // s
    conv1_qr = [((o + P_L) // s, (o + P_L) % s) for o in conv_offs]
    pool_qr = [((o + P_L) // s, (o + P_L) % s) for o in pool_offs]

    # -------- wrapper-side layout plumbing (pure zero-pad / reshape / transpose).
    # x is embedded at channel rows [ch1, ch1+C_in) of a Co-row plane so that the
    # shortcut is already full width and every kernel store is sublane aligned.
    xf = x.astype(jnp.float32)
    x_emb = jnp.zeros((B, Co, L), jnp.float32).at[:, ch1:ch1 + C_in, :].set(xf)
    xpad = jnp.pad(x_emb, ((0, 0), (0, 0), (P_L, Lpad - P_L - L)))
    xph = jnp.transpose(xpad.reshape(B, Co, M, s), (0, 3, 1, 2))     # (B, s, Co, M)

    idx = np.arange(Lpad).reshape(M, s).T                            # idx[r, m] = m*s + r
    mask = ((idx >= P_L) & (idx < P_L + L)).astype(np.float32).reshape(s, 1, M)
    mask = jnp.asarray(mask)

    # fold BN (eval mode) into scale/shift; fold conv1 bias into the BN2 shift;
    # pad / embed everything into the Co-row channel layout (zeros elsewhere).
    def fold_bn(gamma, beta, mean, var):
        scale = (gamma / jnp.sqrt(var + _BN_EPS)).astype(jnp.float32)
        shift = (beta - mean * scale).astype(jnp.float32)
        return scale, shift

    bn1s_c, bn1h_c = fold_bn(*params["bn1"])
    bn1s = jnp.zeros((Co, 1), jnp.float32).at[ch1:ch1 + C_in, 0].set(bn1s_c)
    bn1h = jnp.zeros((Co, 1), jnp.float32).at[ch1:ch1 + C_in, 0].set(bn1h_c)

    bn2s_c, bn2h_c = fold_bn(*params["bn2"])
    bn2h_c = bn2h_c + bn2s_c * params["b1"].astype(jnp.float32)
    bn2s = jnp.zeros((Co, 1), jnp.float32).at[:C_out, 0].set(bn2s_c)
    bn2h = jnp.zeros((Co, 1), jnp.float32).at[:C_out, 0].set(bn2h_c)
    b2 = jnp.zeros((Co, 1), jnp.float32).at[:C_out, 0].set(
        params["b2"].astype(jnp.float32))

    # fused-tap weights in the embedded channel layout:
    #   W1f[o, k*Co + c] = w1[o, c - ch1, k]   W2f[o, k*Co + c] = w2[o, c, k]
    w1e = jnp.zeros((Co, Co, K), jnp.float32).at[:C_out, ch1:ch1 + C_in, :].set(
        params["w1"].astype(jnp.float32))
    w2e = jnp.zeros((Co, Co, K), jnp.float32).at[:C_out, :C_out, :].set(
        params["w2"].astype(jnp.float32))
    w1f = jnp.transpose(w1e, (0, 2, 1)).reshape(Co, K * Co).astype(mxu_dtype)
    w2f = jnp.transpose(w2e, (0, 2, 1)).reshape(Co, K * Co).astype(mxu_dtype)

    # -------- batch blocking + VMEM budget (sized so the tile also fits v7x)
    mxu_bytes = jnp.dtype(mxu_dtype).itemsize
    W2 = Lp + K - 1
    per_row = (2 * s * Co * M * 4            # x block (double-buffered)
               + 2 * Co * Lp * 4             # output block (double-buffered)
               + K * Co * Lp * mxu_bytes     # shared im2col scratch
               + Co * W2 * 4)                # conv2 same-pad planes (f32)
    invariant = 2 * (mask.size * 4 + 5 * Co * 4 + 2 * Co * K * Co * mxu_bytes)
    Bb = _choose_bb(B, per_row, budget_bytes=40 * 1024 * 1024)
    vmem_limit = int(min(max(2 * (Bb * per_row + invariant), 32 << 20), 56 << 20))

    kernel = _make_kernel(is_first_block=is_first_block, K=K, Bb=Bb, Co=Co,
                          L_out=L_out, Lp=Lp, pl2=pl2, W2=W2,
                          conv1_qr=conv1_qr, pool_qr=pool_qr, mxu_dtype=mxu_dtype)

    inputs = (xph, mask, bn1s, bn1h, w1f, bn2s, bn2h, w2f, b2)

    # All operands except xph have constant index maps: the pipeline fetches them
    # once and does not re-DMA them per grid step.
    in_specs = [pl.BlockSpec((Bb, s, Co, M), lambda b: (b, 0, 0, 0))] + \
               [_full_spec(a.shape) for a in inputs[1:]]
    out_specs = pl.BlockSpec((Bb, Co, Lp), lambda b: (b, 0, 0))

    scratch_shapes = [
        pltpu.VMEM((K * Co, Bb * Lp), mxu_dtype),   # shared im2col (conv1 then conv2)
        pltpu.VMEM((Bb, Co, W2), jnp.float32),      # conv2 same-padded planes
    ]

    flops = 2 * 2 * Co * (K * Co) * (B * Lp)
    bytes_accessed = (4 * B * (s * Co * M + Co * Lp)
                      + 2 * Co * K * Co * mxu_bytes
                      + 4 * (mask.size + 5 * Co))
    cost = pl.CostEstimate(flops=int(flops), transcendentals=0,
                           bytes_accessed=int(bytes_accessed))

    out_full = pl.pallas_call(
        kernel,
        out_shape=jax.ShapeDtypeStruct((B, Co, Lp), jnp.float32),
        grid_spec=pltpu.PrefetchScalarGridSpec(
            num_scalar_prefetch=0,
            grid=(B // Bb,),
            in_specs=in_specs,
            out_specs=out_specs,
            scratch_shapes=scratch_shapes,
        ),
        compiler_params=pltpu.CompilerParams(
            dimension_semantics=("parallel",),
            vmem_limit_bytes=vmem_limit,
        ),
        cost_estimate=cost,
    )(*inputs)

    return out_full[:, :C_out, :L_out]        # trim channel / lane padding


# ----------------------------------------------------------------------------
# pure-JAX reference (silent correctness check)
# ----------------------------------------------------------------------------
def residual_block_reference(x, params, *, out_channels, kernel_size, downsample,
                             stride, groups=1, is_first_block=False):
    B, C_in, L = x.shape
    C_out, K = out_channels, kernel_size
    s = stride if downsample else 1

    L_out, pad1, pl1 = _same_pad(L, s, K)
    _, pad2, pl2 = _same_pad(L_out, 1, K)
    _, padp, plp = _same_pad(L, 1, s)

    def bn(y, p):
        g, b, m, v = p
        scale = g / jnp.sqrt(v + _BN_EPS)
        return (y - m[None, :, None]) * scale[None, :, None] + b[None, :, None]

    h = x
    if not is_first_block:
        h = jax.nn.relu(bn(h, params["bn1"]))
    hpad = jnp.pad(h, ((0, 0), (0, 0), (pl1, pad1 - pl1)))
    y = lax.conv_general_dilated(hpad, params["w1"], (s,), "VALID",
                                 dimension_numbers=("NCH", "OIH", "NCH"))
    y = y + params["b1"][None, :, None]
    y = jax.nn.relu(bn(y, params["bn2"]))
    ypad = jnp.pad(y, ((0, 0), (0, 0), (pl2, pad2 - pl2)))
    y = lax.conv_general_dilated(ypad, params["w2"], (1,), "VALID",
                                 dimension_numbers=("NCH", "OIH", "NCH"))
    y = y + params["b2"][None, :, None]

    sc = x
    if downsample:
        xp = jnp.pad(x, ((0, 0), (0, 0), (plp, padp - plp)))   # zero pad joins the max
        sc = lax.reduce_window(xp, -jnp.inf, lax.max, (1, 1, s), (1, 1, s), "VALID")
    if C_out != C_in:
        ch1 = (C_out - C_in) // 2
        sc = jnp.pad(sc, ((0, 0), (ch1, C_out - C_in - ch1), (0, 0)))
    return y + sc


# ----------------------------------------------------------------------------
# main
# ----------------------------------------------------------------------------
def _make_params(key, C_in, C_out, K):
    ks = jax.random.split(key, 12)
    return {
        "w1": 0.3 * jax.random.normal(ks[0], (C_out, C_in, K), jnp.float32),
        "b1": 0.1 * jax.random.normal(ks[1], (C_out,), jnp.float32),
        "w2": 0.3 * jax.random.normal(ks[2], (C_out, C_out, K), jnp.float32),
        "b2": 0.1 * jax.random.normal(ks[3], (C_out,), jnp.float32),
        "bn1": (1.0 + 0.1 * jax.random.normal(ks[4], (C_in,), jnp.float32),
                0.1 * jax.random.normal(ks[5], (C_in,), jnp.float32),
                0.1 * jax.random.normal(ks[6], (C_in,), jnp.float32),
                jnp.abs(1.0 + 0.1 * jax.random.normal(ks[7], (C_in,), jnp.float32))),
        "bn2": (1.0 + 0.1 * jax.random.normal(ks[8], (C_out,), jnp.float32),
                0.1 * jax.random.normal(ks[9], (C_out,), jnp.float32),
                0.1 * jax.random.normal(ks[10], (C_out,), jnp.float32),
                jnp.abs(1.0 + 0.1 * jax.random.normal(ks[11], (C_out,), jnp.float32))),
    }


if __name__ == "__main__":
    key = jax.random.PRNGKey(0)
    k_x1, k_p1, k_x2, k_p2 = jax.random.split(key, 4)

    # ---- Config 1: non-first block, downsampling, channel expansion.
    B, C_in, C_out, K, L = 8, 4, 8, 3, 16
    x1 = jax.random.normal(k_x1, (B, C_in, L), jnp.float32)
    p1 = _make_params(k_p1, C_in, C_out, K)
    cfg1 = dict(out_channels=C_out, kernel_size=K, downsample=True, stride=2,
                groups=1, is_first_block=False)

    ref1 = jax.block_until_ready(residual_block_reference(x1, p1, **cfg1))

    # f32 MXU operands: exact-semantics check.
    out1 = jax.block_until_ready(residual_block_pallas(x1, p1, **cfg1))
    assert out1.shape == ref1.shape, (out1.shape, ref1.shape)
    np.testing.assert_allclose(np.asarray(out1), np.asarray(ref1), rtol=1e-4, atol=1e-4)

    # bf16 MXU operands / bf16 im2col with f32 accumulation (v6e/v7x): loose check.
    out1_bf16 = jax.block_until_ready(
        residual_block_pallas(x1, p1, mxu_dtype=jnp.bfloat16, **cfg1))
    assert out1_bf16.shape == ref1.shape
    max_err = float(jnp.max(jnp.abs(out1_bf16 - ref1)))
    assert np.isfinite(max_err) and max_err < 0.25, f"bf16 path diverged: {max_err}"

    # ---- Config 2: first block, no downsampling, C_in == C_out (exercises the
    # s = 1 path and the Co channel padding / trimming).
    B2, C2, K2, L2 = 8, 4, 3, 16
    x2 = jax.random.normal(k_x2, (B2, C2, L2), jnp.float32)
    p2 = _make_params(k_p2, C2, C2, K2)
    cfg2 = dict(out_channels=C2, kernel_size=K2, downsample=False, stride=2,
                groups=1, is_first_block=True)
    ref2 = jax.block_until_ready(residual_block_reference(x2, p2, **cfg2))
    out2 = jax.block_until_ready(residual_block_pallas(x2, p2, **cfg2))
    assert out2.shape == ref2.shape, (out2.shape, ref2.shape)
    np.testing.assert_allclose(np.asarray(out2), np.asarray(ref2), rtol=1e-4, atol=1e-4)

    print("KERNEL_OK")
</pallas_src>

<mosaic_0001>
module attributes {stable_mosaic.version = 11 : i64} {
  func.func @kernel(%arg0: i32, %arg1: memref<2x2x8x129xf32, #tpu.memory_space<vmem>>, %arg2: memref<2x1x129xf32, #tpu.memory_space<vmem>>, %arg3: memref<8x1xf32, #tpu.memory_space<vmem>>, %arg4: memref<8x1xf32, #tpu.memory_space<vmem>>, %arg5: memref<8x24xf32, #tpu.memory_space<vmem>>, %arg6: memref<8x1xf32, #tpu.memory_space<vmem>>, %arg7: memref<8x1xf32, #tpu.memory_space<vmem>>, %arg8: memref<8x24xf32, #tpu.memory_space<vmem>>, %arg9: memref<8x1xf32, #tpu.memory_space<vmem>>, %arg10: memref<2x8x128xf32, #tpu.memory_space<vmem>>, %arg11: memref<24x256xf32, #tpu.memory_space<vmem>>, %arg12: memref<2x8x130xf32, #tpu.memory_space<vmem>>) attributes {dimension_semantics = [#tpu.dimension_semantics<parallel>], iteration_bounds = array<i64: 4>, scalar_prefetch = 0 : i64, scratch_operands = 2 : i64, tpu.core_type = #tpu.core_type<tc>, window_params = [{transform_indices = @transform_0, window_bounds = array<i64: 2, 2, 8, 129>}, {pipeline_mode = #tpu.pipeline_mode<synchronous>, transform_indices = @transform_1, window_bounds = array<i64: 2, 1, 129>}, {pipeline_mode = #tpu.pipeline_mode<synchronous>, transform_indices = @transform_2, window_bounds = array<i64: 8, 1>}, {pipeline_mode = #tpu.pipeline_mode<synchronous>, transform_indices = @transform_3, window_bounds = array<i64: 8, 1>}, {pipeline_mode = #tpu.pipeline_mode<synchronous>, transform_indices = @transform_4, window_bounds = array<i64: 8, 24>}, {pipeline_mode = #tpu.pipeline_mode<synchronous>, transform_indices = @transform_5, window_bounds = array<i64: 8, 1>}, {pipeline_mode = #tpu.pipeline_mode<synchronous>, transform_indices = @transform_6, window_bounds = array<i64: 8, 1>}, {pipeline_mode = #tpu.pipeline_mode<synchronous>, transform_indices = @transform_7, window_bounds = array<i64: 8, 24>}, {pipeline_mode = #tpu.pipeline_mode<synchronous>, transform_indices = @transform_8, window_bounds = array<i64: 8, 1>}, {transform_indices = @transform_9, window_bounds = array<i64: 2, 8, 128>}]} {
    %c0 = arith.constant 0 : index
    %c0_0 = arith.constant 0 : index
    %c0_1 = arith.constant 0 : index
    %c0_2 = arith.constant 0 : index
    %0 = vector.load %arg1[%c0, %c0_0, %c0_1, %c0_2] : memref<2x2x8x129xf32, #tpu.memory_space<vmem>>, vector<1x1x8x128xf32>
    %1 = vector.shape_cast %0 : vector<1x1x8x128xf32> to vector<8x128xf32>
    %c0_3 = arith.constant 0 : index
    %c0_4 = arith.constant 0 : index
    %2 = vector.load %arg3[%c0_3, %c0_4] : memref<8x1xf32, #tpu.memory_space<vmem>>, vector<8x1xf32>
    %3 = vector.broadcast %2 : vector<8x1xf32> to vector<8x128xf32>
    %4 = arith.mulf %1, %3 : vector<8x128xf32>
    %c0_5 = arith.constant 0 : index
    %c0_6 = arith.constant 0 : index
    %5 = vector.load %arg4[%c0_5, %c0_6] : memref<8x1xf32, #tpu.memory_space<vmem>>, vector<8x1xf32>
    %6 = vector.broadcast %5 : vector<8x1xf32> to vector<8x128xf32>
    %7 = arith.addf %4, %6 : vector<8x128xf32>
    %cst = arith.constant 0.000000e+00 : f32
    %8 = vector.broadcast %cst : f32 to vector<8x128xf32>
    %9 = arith.maximumf %7, %8 : vector<8x128xf32>
    %c0_7 = arith.constant 0 : index
    %c0_8 = arith.constant 0 : index
    %c0_9 = arith.constant 0 : index
    %10 = vector.load %arg2[%c0_7, %c0_8, %c0_9] : memref<2x1x129xf32, #tpu.memory_space<vmem>>, vector<1x1x128xf32>
    %11 = vector.shape_cast %10 : vector<1x1x128xf32> to vector<1x128xf32>
    %12 = vector.broadcast %11 : vector<1x128xf32> to vector<8x128xf32>
    %13 = arith.mulf %9, %12 : vector<8x128xf32>
    %c0_10 = arith.constant 0 : index
    %c0_11 = arith.constant 0 : index
    %14 = vector.load %arg11[%c0_10, %c0_11] : memref<24x256xf32, #tpu.memory_space<vmem>>, vector<8x128xf32>
    tpu.vector_store %arg11[%c0_10, %c0_11], %13 {strides = array<i32>} : memref<24x256xf32, #tpu.memory_space<vmem>>, vector<8x128xf32>,
    %c0_12 = arith.constant 0 : index
    %c1 = arith.constant 1 : index
    %c0_13 = arith.constant 0 : index
    %c0_14 = arith.constant 0 : index
    %15 = vector.load %arg1[%c0_12, %c1, %c0_13, %c0_14] : memref<2x2x8x129xf32, #tpu.memory_space<vmem>>, vector<1x1x8x128xf32>
    %16 = vector.shape_cast %15 : vector<1x1x8x128xf32> to vector<8x128xf32>
    %c0_15 = arith.constant 0 : index
    %c0_16 = arith.constant 0 : index
    %17 = vector.load %arg3[%c0_15, %c0_16] : memref<8x1xf32, #tpu.memory_space<vmem>>, vector<8x1xf32>
    %18 = vector.broadcast %17 : vector<8x1xf32> to vector<8x128xf32>
    %19 = arith.mulf %16, %18 : vector<8x128xf32>
    %c0_17 = arith.constant 0 : index
    %c0_18 = arith.constant 0 : index
    %20 = vector.load %arg4[%c0_17, %c0_18] : memref<8x1xf32, #tpu.memory_space<vmem>>, vector<8x1xf32>
    %21 = vector.broadcast %20 : vector<8x1xf32> to vector<8x128xf32>
    %22 = arith.addf %19, %21 : vector<8x128xf32>
    %cst_19 = arith.constant 0.000000e+00 : f32
    %23 = vector.broadcast %cst_19 : f32 to vector<8x128xf32>
    %24 = arith.maximumf %22, %23 : vector<8x128xf32>
    %c1_20 = arith.constant 1 : index
    %c0_21 = arith.constant 0 : index
    %c0_22 = arith.constant 0 : index
    %25 = vector.load %arg2[%c1_20, %c0_21, %c0_22] : memref<2x1x129xf32, #tpu.memory_space<vmem>>, vector<1x1x128xf32>
    %26 = vector.shape_cast %25 : vector<1x1x128xf32> to vector<1x128xf32>
    %27 = vector.broadcast %26 : vector<1x128xf32> to vector<8x128xf32>
    %28 = arith.mulf %24, %27 : vector<8x128xf32>
    %c8 = arith.constant 8 : index
    %c0_23 = arith.constant 0 : index
    %29 = vector.load %arg11[%c8, %c0_23] : memref<24x256xf32, #tpu.memory_space<vmem>>, vector<8x128xf32>
    tpu.vector_store %arg11[%c8, %c0_23], %28 {strides = array<i32>} : memref<24x256xf32, #tpu.memory_space<vmem>>, vector<8x128xf32>,
    %c0_24 = arith.constant 0 : index
    %c0_25 = arith.constant 0 : index
    %c0_26 = arith.constant 0 : index
    %c1_27 = arith.constant 1 : index
    %30 = vector.load %arg1[%c0_24, %c0_25, %c0_26, %c1_27] : memref<2x2x8x129xf32, #tpu.memory_space<vmem>>, vector<1x1x8x128xf32>
    %31 = vector.shape_cast %30 : vector<1x1x8x128xf32> to vector<8x128xf32>
    %c0_28 = arith.constant 0 : index
    %c0_29 = arith.constant 0 : index
    %32 = vector.load %arg3[%c0_28, %c0_29] : memref<8x1xf32, #tpu.memory_space<vmem>>, vector<8x1xf32>
    %33 = vector.broadcast %32 : vector<8x1xf32> to vector<8x128xf32>
    %34 = arith.mulf %31, %33 : vector<8x128xf32>
    %c0_30 = arith.constant 0 : index
    %c0_31 = arith.constant 0 : index
    %35 = vector.load %arg4[%c0_30, %c0_31] : memref<8x1xf32, #tpu.memory_space<vmem>>, vector<8x1xf32>
    %36 = vector.broadcast %35 : vector<8x1xf32> to vector<8x128xf32>
    %37 = arith.addf %34, %36 : vector<8x128xf32>
    %cst_32 = arith.constant 0.000000e+00 : f32
    %38 = vector.broadcast %cst_32 : f32 to vector<8x128xf32>
    %39 = arith.maximumf %37, %38 : vector<8x128xf32>
    %c0_33 = arith.constant 0 : index
    %c0_34 = arith.constant 0 : index
    %c1_35 = arith.constant 1 : index
    %40 = vector.load %arg2[%c0_33, %c0_34, %c1_35] : memref<2x1x129xf32, #tpu.memory_space<vmem>>, vector<1x1x128xf32>
    %41 = vector.shape_cast %40 : vector<1x1x128xf32> to vector<1x128xf32>
    %42 = vector.broadcast %41 : vector<1x128xf32> to vector<8x128xf32>
    %43 = arith.mulf %39, %42 : vector<8x128xf32>
    %c16 = arith.constant 16 : index
    %c0_36 = arith.constant 0 : index
    %44 = vector.load %arg11[%c16, %c0_36] : memref<24x256xf32, #tpu.memory_space<vmem>>, vector<8x128xf32>
    tpu.vector_store %arg11[%c16, %c0_36], %43 {strides = array<i32>} : memref<24x256xf32, #tpu.memory_space<vmem>>, vector<8x128xf32>,
    %c1_37 = arith.constant 1 : index
    %c0_38 = arith.constant 0 : index
    %c0_39 = arith.constant 0 : index
    %c0_40 = arith.constant 0 : index
    %45 = vector.load %arg1[%c1_37, %c0_38, %c0_39, %c0_40] : memref<2x2x8x129xf32, #tpu.memory_space<vmem>>, vector<1x1x8x128xf32>
    %46 = vector.shape_cast %45 : vector<1x1x8x128xf32> to vector<8x128xf32>
    %c0_41 = arith.constant 0 : index
    %c0_42 = arith.constant 0 : index
    %47 = vector.load %arg3[%c0_41, %c0_42] : memref<8x1xf32, #tpu.memory_space<vmem>>, vector<8x1xf32>
    %48 = vector.broadcast %47 : vector<8x1xf32> to vector<8x128xf32>
    %49 = arith.mulf %46, %48 : vector<8x128xf32>
    %c0_43 = arith.constant 0 : index
    %c0_44 = arith.constant 0 : index
    %50 = vector.load %arg4[%c0_43, %c0_44] : memref<8x1xf32, #tpu.memory_space<vmem>>, vector<8x1xf32>
    %51 = vector.broadcast %50 : vector<8x1xf32> to vector<8x128xf32>
    %52 = arith.addf %49, %51 : vector<8x128xf32>
    %cst_45 = arith.constant 0.000000e+00 : f32
    %53 = vector.broadcast %cst_45 : f32 to vector<8x128xf32>
    %54 = arith.maximumf %52, %53 : vector<8x128xf32>
    %c0_46 = arith.constant 0 : index
    %c0_47 = arith.constant 0 : index
    %c0_48 = arith.constant 0 : index
    %55 = vector.load %arg2[%c0_46, %c0_47, %c0_48] : memref<2x1x129xf32, #tpu.memory_space<vmem>>, vector<1x1x128xf32>
    %56 = vector.shape_cast %55 : vector<1x1x128xf32> to vector<1x128xf32>
    %57 = vector.broadcast %56 : vector<1x128xf32> to vector<8x128xf32>
    %58 = arith.mulf %54, %57 : vector<8x128xf32>
    %c0_49 = arith.constant 0 : index
    %c128 = arith.constant 128 : index
    %59 = vector.load %arg11[%c0_49, %c128] : memref<24x256xf32, #tpu.memory_space<vmem>>, vector<8x128xf32>
    tpu.vector_store %arg11[%c0_49, %c128], %58 {strides = array<i32>} : memref<24x256xf32, #tpu.memory_space<vmem>>, vector<8x128xf32>,
    %c1_50 = arith.constant 1 : index
    %c1_51 = arith.constant 1 : index
    %c0_52 = arith.constant 0 : index
    %c0_53 = arith.constant 0 : index
    %60 = vector.load %arg1[%c1_50, %c1_51, %c0_52, %c0_53] : memref<2x2x8x129xf32, #tpu.memory_space<vmem>>, vector<1x1x8x128xf32>
    %61 = vector.shape_cast %60 : vector<1x1x8x128xf32> to vector<8x128xf32>
    %c0_54 = arith.constant 0 : index
    %c0_55 = arith.constant 0 : index
    %62 = vector.load %arg3[%c0_54, %c0_55] : memref<8x1xf32, #tpu.memory_space<vmem>>, vector<8x1xf32>
    %63 = vector.broadcast %62 : vector<8x1xf32> to vector<8x128xf32>
    %64 = arith.mulf %61, %63 : vector<8x128xf32>
    %c0_56 = arith.constant 0 : index
    %c0_57 = arith.constant 0 : index
    %65 = vector.load %arg4[%c0_56, %c0_57] : memref<8x1xf32, #tpu.memory_space<vmem>>, vector<8x1xf32>
    %66 = vector.broadcast %65 : vector<8x1xf32> to vector<8x128xf32>
    %67 = arith.addf %64, %66 : vector<8x128xf32>
    %cst_58 = arith.constant 0.000000e+00 : f32
    %68 = vector.broadcast %cst_58 : f32 to vector<8x128xf32>
    %69 = arith.maximumf %67, %68 : vector<8x128xf32>
    %c1_59 = arith.constant 1 : index
    %c0_60 = arith.constant 0 : index
    %c0_61 = arith.constant 0 : index
    %70 = vector.load %arg2[%c1_59, %c0_60, %c0_61] : memref<2x1x129xf32, #tpu.memory_space<vmem>>, vector<1x1x128xf32>
    %71 = vector.shape_cast %70 : vector<1x1x128xf32> to vector<1x128xf32>
    %72 = vector.broadcast %71 : vector<1x128xf32> to vector<8x128xf32>
    %73 = arith.mulf %69, %72 : vector<8x128xf32>
    %c8_62 = arith.constant 8 : index
    %c128_63 = arith.constant 128 : index
    %74 = vector.load %arg11[%c8_62, %c128_63] : memref<24x256xf32, #tpu.memory_space<vmem>>, vector<8x128xf32>
    tpu.vector_store %arg11[%c8_62, %c128_63], %73 {strides = array<i32>} : memref<24x256xf32, #tpu.memory_space<vmem>>, vector<8x128xf32>,
    %c1_64 = arith.constant 1 : index
    %c0_65 = arith.constant 0 : index
    %c0_66 = arith.constant 0 : index
    %c1_67 = arith.constant 1 : index
    %75 = vector.load %arg1[%c1_64, %c0_65, %c0_66, %c1_67] : memref<2x2x8x129xf32, #tpu.memory_space<vmem>>, vector<1x1x8x128xf32>
    %76 = vector.shape_cast %75 : vector<1x1x8x128xf32> to vector<8x128xf32>
    %c0_68 = arith.constant 0 : index
    %c0_69 = arith.constant 0 : index
    %77 = vector.load %arg3[%c0_68, %c0_69] : memref<8x1xf32, #tpu.memory_space<vmem>>, vector<8x1xf32>
    %78 = vector.broadcast %77 : vector<8x1xf32> to vector<8x128xf32>
    %79 = arith.mulf %76, %78 : vector<8x128xf32>
    %c0_70 = arith.constant 0 : index
    %c0_71 = arith.constant 0 : index
    %80 = vector.load %arg4[%c0_70, %c0_71] : memref<8x1xf32, #tpu.memory_space<vmem>>, vector<8x1xf32>
    %81 = vector.broadcast %80 : vector<8x1xf32> to vector<8x128xf32>
    %82 = arith.addf %79, %81 : vector<8x128xf32>
    %cst_72 = arith.constant 0.000000e+00 : f32
    %83 = vector.broadcast %cst_72 : f32 to vector<8x128xf32>
    %84 = arith.maximumf %82, %83 : vector<8x128xf32>
    %c0_73 = arith.constant 0 : index
    %c0_74 = arith.constant 0 : index
    %c1_75 = arith.constant 1 : index
    %85 = vector.load %arg2[%c0_73, %c0_74, %c1_75] : memref<2x1x129xf32, #tpu.memory_space<vmem>>, vector<1x1x128xf32>
    %86 = vector.shape_cast %85 : vector<1x1x128xf32> to vector<1x128xf32>
    %87 = vector.broadcast %86 : vector<1x128xf32> to vector<8x128xf32>
    %88 = arith.mulf %84, %87 : vector<8x128xf32>
    %c16_76 = arith.constant 16 : index
    %c128_77 = arith.constant 128 : index
    %89 = vector.load %arg11[%c16_76, %c128_77] : memref<24x256xf32, #tpu.memory_space<vmem>>, vector<8x128xf32>
    tpu.vector_store %arg11[%c16_76, %c128_77], %88 {strides = array<i32>} : memref<24x256xf32, #tpu.memory_space<vmem>>, vector<8x128xf32>,
    %c0_78 = arith.constant 0 : index
    %c0_79 = arith.constant 0 : index
    %90 = vector.load %arg5[%c0_78, %c0_79] : memref<8x24xf32, #tpu.memory_space<vmem>>, vector<8x24xf32>
    %c0_80 = arith.constant 0 : index
    %c0_81 = arith.constant 0 : index
    %91 = vector.load %arg11[%c0_80, %c0_81] : memref<24x256xf32, #tpu.memory_space<vmem>>, vector<24x256xf32>
    %cst_82 = arith.constant dense<0.000000e+00> : vector<8x256xf32>
    %92 = tpu.matmul %90, %91, %cst_82 {dimension_numbers = #tpu.dot_dimension_numbers<[1], [0], [0], [1], [0, 0, 1, 1], [], []>} : vector<8x24xf32>, vector<24x256xf32>, vector<8x256xf32> -> vector<8x256xf32>
    %c0_83 = arith.constant 0 : index
    %c0_84 = arith.constant 0 : index
    %93 = vector.load %arg6[%c0_83, %c0_84] : memref<8x1xf32, #tpu.memory_space<vmem>>, vector<8x1xf32>
    %94 = vector.broadcast %93 : vector<8x1xf32> to vector<8x256xf32>
    %95 = arith.mulf %92, %94 : vector<8x256xf32>
    %c0_85 = arith.constant 0 : index
    %c0_86 = arith.constant 0 : index
    %96 = vector.load %arg7[%c0_85, %c0_86] : memref<8x1xf32, #tpu.memory_space<vmem>>, vector<8x1xf32>
    %97 = vector.broadcast %96 : vector<8x1xf32> to vector<8x256xf32>
    %98 = arith.addf %95, %97 : vector<8x256xf32>
    %cst_87 = arith.constant 0.000000e+00 : f32
    %99 = vector.broadcast %cst_87 : f32 to vector<8x256xf32>
    %100 = arith.maximumf %98, %99 : vector<8x256xf32>
    %cst_88 = arith.constant 0.000000e+00 : f32
    %101 = vector.broadcast %cst_88 : f32 to vector<8x1xf32>
    %c0_89 = arith.constant 0 : index
    %c0_90 = arith.constant 0 : index
    %c0_91 = arith.constant 0 : index
    %102 = vector.load %arg12[%c0_89, %c0_90, %c0_91] : memref<2x8x130xf32, #tpu.memory_space<vmem>>, vector<1x8x1xf32>
    %103 = vector.shape_cast %102 : vector<1x8x1xf32> to vector<8x1xf32>
    %104 = vector.shape_cast %101 : vector<8x1xf32> to vector<1x8x1xf32>
    tpu.vector_store %arg12[%c0_89, %c0_90, %c0_91], %104 {strides = array<i32>} : memref<2x8x130xf32, #tpu.memory_space<vmem>>, vector<1x8x1xf32>,
    %cst_92 = arith.constant 0.000000e+00 : f32
    %105 = vector.broadcast %cst_92 : f32 to vector<8x121xf32>
    %c0_93 = arith.constant 0 : index
    %c0_94 = arith.constant 0 : index
    %c9 = arith.constant 9 : index
    %106 = vector.load %arg12[%c0_93, %c0_94, %c9] : memref<2x8x130xf32, #tpu.memory_space<vmem>>, vector<1x8x121xf32>
    %107 = vector.shape_cast %106 : vector<1x8x121xf32> to vector<8x121xf32>
    %108 = vector.shape_cast %105 : vector<8x121xf32> to vector<1x8x121xf32>
    tpu.vector_store %arg12[%c0_93, %c0_94, %c9], %108 {strides = array<i32>} : memref<2x8x130xf32, #tpu.memory_space<vmem>>, vector<1x8x121xf32>,
    %109 = vector.extract_strided_slice %100 {offsets = [0, 0], sizes = [8, 8], strides = [1, 1]} : vector<8x256xf32> to vector<8x8xf32>
    %c0_95 = arith.constant 0 : index
    %c0_96 = arith.constant 0 : index
    %c1_97 = arith.constant 1 : index
    %110 = vector.load %arg12[%c0_95, %c0_96, %c1_97] : memref<2x8x130xf32, #tpu.memory_space<vmem>>, vector<1x8x8xf32>
    %111 = vector.shape_cast %110 : vector<1x8x8xf32> to vector<8x8xf32>
    %112 = vector.shape_cast %109 : vector<8x8xf32> to vector<1x8x8xf32>
    tpu.vector_store %arg12[%c0_95, %c0_96, %c1_97], %112 {strides = array<i32>} : memref<2x8x130xf32, #tpu.memory_space<vmem>>, vector<1x8x8xf32>,
    %cst_98 = arith.constant 0.000000e+00 : f32
    %113 = vector.broadcast %cst_98 : f32 to vector<8x1xf32>
    %c1_99 = arith.constant 1 : index
    %c0_100 = arith.constant 0 : index
    %c0_101 = arith.constant 0 : index
    %114 = vector.load %arg12[%c1_99, %c0_100, %c0_101] : memref<2x8x130xf32, #tpu.memory_space<vmem>>, vector<1x8x1xf32>
    %115 = vector.shape_cast %114 : vector<1x8x1xf32> to vector<8x1xf32>
    %116 = vector.shape_cast %113 : vector<8x1xf32> to vector<1x8x1xf32>
    tpu.vector_store %arg12[%c1_99, %c0_100, %c0_101], %116 {strides = array<i32>} : memref<2x8x130xf32, #tpu.memory_space<vmem>>, vector<1x8x1xf32>,
    %cst_102 = arith.constant 0.000000e+00 : f32
    %117 = vector.broadcast %cst_102 : f32 to vector<8x121xf32>
    %c1_103 = arith.constant 1 : index
    %c0_104 = arith.constant 0 : index
    %c9_105 = arith.constant 9 : index
    %118 = vector.load %arg12[%c1_103, %c0_104, %c9_105] : memref<2x8x130xf32, #tpu.memory_space<vmem>>, vector<1x8x121xf32>
    %119 = vector.shape_cast %118 : vector<1x8x121xf32> to vector<8x121xf32>
    %120 = vector.shape_cast %117 : vector<8x121xf32> to vector<1x8x121xf32>
    tpu.vector_store %arg12[%c1_103, %c0_104, %c9_105], %120 {strides = array<i32>} : memref<2x8x130xf32, #tpu.memory_space<vmem>>, vector<1x8x121xf32>,
    %121 = vector.extract_strided_slice %100 {offsets = [0, 128], sizes = [8, 8], strides = [1, 1]} : vector<8x256xf32> to vector<8x8xf32>
    %c1_106 = arith.constant 1 : index
    %c0_107 = arith.constant 0 : index
    %c1_108 = arith.constant 1 : index
    %122 = vector.load %arg12[%c1_106, %c0_107, %c1_108] : memref<2x8x130xf32, #tpu.memory_space<vmem>>, vector<1x8x8xf32>
    %123 = vector.shape_cast %122 : vector<1x8x8xf32> to vector<8x8xf32>
    %124 = vector.shape_cast %121 : vector<8x8xf32> to vector<1x8x8xf32>
    tpu.vector_store %arg12[%c1_106, %c0_107, %c1_108], %124 {strides = array<i32>} : memref<2x8x130xf32, #tpu.memory_space<vmem>>, vector<1x8x8xf32>,
    %c0_109 = arith.constant 0 : index
    %c0_110 = arith.constant 0 : index
    %c0_111 = arith.constant 0 : index
    %125 = vector.load %arg12[%c0_109, %c0_110, %c0_111] : memref<2x8x130xf32, #tpu.memory_space<vmem>>, vector<1x8x128xf32>
    %126 = vector.shape_cast %125 : vector<1x8x128xf32> to vector<8x128xf32>
    %c0_112 = arith.constant 0 : index
    %c0_113 = arith.constant 0 : index
    %127 = vector.load %arg11[%c0_112, %c0_113] : memref<24x256xf32, #tpu.memory_space<vmem>>, vector<8x128xf32>
    tpu.vector_store %arg11[%c0_112, %c0_113], %126 {strides = array<i32>} : memref<24x256xf32, #tpu.memory_space<vmem>>, vector<8x128xf32>,
    %c0_114 = arith.constant 0 : index
    %c0_115 = arith.constant 0 : index
    %c1_116 = arith.constant 1 : index
    %128 = vector.load %arg12[%c0_114, %c0_115, %c1_116] : memref<2x8x130xf32, #tpu.memory_space<vmem>>, vector<1x8x128xf32>
    %129 = vector.shape_cast %128 : vector<1x8x128xf32> to vector<8x128xf32>
    %c8_117 = arith.constant 8 : index
    %c0_118 = arith.constant 0 : index
    %130 = vector.load %arg11[%c8_117, %c0_118] : memref<24x256xf32, #tpu.memory_space<vmem>>, vector<8x128xf32>
    tpu.vector_store %arg11[%c8_117, %c0_118], %129 {strides = array<i32>} : memref<24x256xf32, #tpu.memory_space<vmem>>, vector<8x128xf32>,
    %c0_119 = arith.constant 0 : index
    %c0_120 = arith.constant 0 : index
    %c2 = arith.constant 2 : index
    %131 = vector.load %arg12[%c0_119, %c0_120, %c2] : memref<2x8x130xf32, #tpu.memory_space<vmem>>, vector<1x8x128xf32>
    %132 = vector.shape_cast %131 : vector<1x8x128xf32> to vector<8x128xf32>
    %c16_121 = arith.constant 16 : index
    %c0_122 = arith.constant 0 : index
    %133 = vector.load %arg11[%c16_121, %c0_122] : memref<24x256xf32, #tpu.memory_space<vmem>>, vector<8x128xf32>
    tpu.vector_store %arg11[%c16_121, %c0_122], %132 {strides = array<i32>} : memref<24x256xf32, #tpu.memory_space<vmem>>, vector<8x128xf32>,
    %c1_123 = arith.constant 1 : index
    %c0_124 = arith.constant 0 : index
    %c0_125 = arith.constant 0 : index
    %134 = vector.load %arg12[%c1_123, %c0_124, %c0_125] : memref<2x8x130xf32, #tpu.memory_space<vmem>>, vector<1x8x128xf32>
    %135 = vector.shape_cast %134 : vector<1x8x128xf32> to vector<8x128xf32>
    %c0_126 = arith.constant 0 : index
    %c128_127 = arith.constant 128 : index
    %136 = vector.load %arg11[%c0_126, %c128_127] : memref<24x256xf32, #tpu.memory_space<vmem>>, vector<8x128xf32>
    tpu.vector_store %arg11[%c0_126, %c128_127], %135 {strides = array<i32>} : memref<24x256xf32, #tpu.memory_space<vmem>>, vector<8x128xf32>,
    %c1_128 = arith.constant 1 : index
    %c0_129 = arith.constant 0 : index
    %c1_130 = arith.constant 1 : index
    %137 = vector.load %arg12[%c1_128, %c0_129, %c1_130] : memref<2x8x130xf32, #tpu.memory_space<vmem>>, vector<1x8x128xf32>
    %138 = vector.shape_cast %137 : vector<1x8x128xf32> to vector<8x128xf32>
    %c8_131 = arith.constant 8 : index
    %c128_132 = arith.constant 128 : index
    %139 = vector.load %arg11[%c8_131, %c128_132] : memref<24x256xf32, #tpu.memory_space<vmem>>, vector<8x128xf32>
    tpu.vector_store %arg11[%c8_131, %c128_132], %138 {strides = array<i32>} : memref<24x256xf32, #tpu.memory_space<vmem>>, vector<8x128xf32>,
    %c1_133 = arith.constant 1 : index
    %c0_134 = arith.constant 0 : index
    %c2_135 = arith.constant 2 : index
    %140 = vector.load %arg12[%c1_133, %c0_134, %c2_135] : memref<2x8x130xf32, #tpu.memory_space<vmem>>, vector<1x8x128xf32>
    %141 = vector.shape_cast %140 : vector<1x8x128xf32> to vector<8x128xf32>
    %c16_136 = arith.constant 16 : index
    %c128_137 = arith.constant 128 : index
    %142 = vector.load %arg11[%c16_136, %c128_137] : memref<24x256xf32, #tpu.memory_space<vmem>>, vector<8x128xf32>
    tpu.vector_store %arg11[%c16_136, %c128_137], %141 {strides = array<i32>} : memref<24x256xf32, #tpu.memory_space<vmem>>, vector<8x128xf32>,
    %c0_138 = arith.constant 0 : index
    %c0_139 = arith.constant 0 : index
    %143 = vector.load %arg8[%c0_138, %c0_139] : memref<8x24xf32, #tpu.memory_space<vmem>>, vector<8x24xf32>
    %c0_140 = arith.constant 0 : index
    %c0_141 = arith.constant 0 : index
    %144 = vector.load %arg11[%c0_140, %c0_141] : memref<24x256xf32, #tpu.memory_space<vmem>>, vector<24x256xf32>
    %cst_142 = arith.constant dense<0.000000e+00> : vector<8x256xf32>
    %145 = tpu.matmul %143, %144, %cst_142 {dimension_numbers = #tpu.dot_dimension_numbers<[1], [0], [0], [1], [0, 0, 1, 1], [], []>} : vector<8x24xf32>, vector<24x256xf32>, vector<8x256xf32> -> vector<8x256xf32>
    %c0_143 = arith.constant 0 : index
    %c0_144 = arith.constant 0 : index
    %146 = vector.load %arg9[%c0_143, %c0_144] : memref<8x1xf32, #tpu.memory_space<vmem>>, vector<8x1xf32>
    %147 = vector.broadcast %146 : vector<8x1xf32> to vector<8x256xf32>
    %148 = arith.addf %145, %147 : vector<8x256xf32>
    %c0_145 = arith.constant 0 : index
    %c0_146 = arith.constant 0 : index
    %c0_147 = arith.constant 0 : index
    %c0_148 = arith.constant 0 : index
    %149 = vector.load %arg1[%c0_145, %c0_146, %c0_147, %c0_148] : memref<2x2x8x129xf32, #tpu.memory_space<vmem>>, vector<1x1x8x128xf32>
    %150 = vector.shape_cast %149 : vector<1x1x8x128xf32> to vector<8x128xf32>
    %c0_149 = arith.constant 0 : index
    %c1_150 = arith.constant 1 : index
    %c0_151 = arith.constant 0 : index
    %c0_152 = arith.constant 0 : index
    %151 = vector.load %arg1[%c0_149, %c1_150, %c0_151, %c0_152] : memref<2x2x8x129xf32, #tpu.memory_space<vmem>>, vector<1x1x8x128xf32>
    %152 = vector.shape_cast %151 : vector<1x1x8x128xf32> to vector<8x128xf32>
    %153 = arith.maximumf %150, %152 : vector<8x128xf32>
    %154 = vector.extract_strided_slice %148 {offsets = [0, 0], sizes = [8, 128], strides = [1, 1]} : vector<8x256xf32> to vector<8x128xf32>
    %155 = arith.addf %154, %153 : vector<8x128xf32>
    %c0_153 = arith.constant 0 : index
    %c0_154 = arith.constant 0 : index
    %c0_155 = arith.constant 0 : index
    %156 = vector.load %arg10[%c0_153, %c0_154, %c0_155] : memref<2x8x128xf32, #tpu.memory_space<vmem>>, vector<1x8x128xf32>
    %157 = vector.shape_cast %156 : vector<1x8x128xf32> to vector<8x128xf32>
    %158 = vector.shape_cast %155 : vector<8x128xf32> to vector<1x8x128xf32>
    tpu.vector_store %arg10[%c0_153, %c0_154, %c0_155], %158 {strides = array<i32>} : memref<2x8x128xf32, #tpu.memory_space<vmem>>, vector<1x8x128xf32>,
    %c1_156 = arith.constant 1 : index
    %c0_157 = arith.constant 0 : index
    %c0_158 = arith.constant 0 : index
    %c0_159 = arith.constant 0 : index
    %159 = vector.load %arg1[%c1_156, %c0_157, %c0_158, %c0_159] : memref<2x2x8x129xf32, #tpu.memory_space<vmem>>, vector<1x1x8x128xf32>
    %160 = vector.shape_cast %159 : vector<1x1x8x128xf32> to vector<8x128xf32>
    %c1_160 = arith.constant 1 : index
    %c1_161 = arith.constant 1 : index
    %c0_162 = arith.constant 0 : index
    %c0_163 = arith.constant 0 : index
    %161 = vector.load %arg1[%c1_160, %c1_161, %c0_162, %c0_163] : memref<2x2x8x129xf32, #tpu.memory_space<vmem>>, vector<1x1x8x128xf32>
    %162 = vector.shape_cast %161 : vector<1x1x8x128xf32> to vector<8x128xf32>
    %163 = arith.maximumf %160, %162 : vector<8x128xf32>
    %164 = vector.extract_strided_slice %148 {offsets = [0, 128], sizes = [8, 128], strides = [1, 1]} : vector<8x256xf32> to vector<8x128xf32>
    %165 = arith.addf %164, %163 : vector<8x128xf32>
    %c1_164 = arith.constant 1 : index
    %c0_165 = arith.constant 0 : index
    %c0_166 = arith.constant 0 : index
    %166 = vector.load %arg10[%c1_164, %c0_165, %c0_166] : memref<2x8x128xf32, #tpu.memory_space<vmem>>, vector<1x8x128xf32>
    %167 = vector.shape_cast %166 : vector<1x8x128xf32> to vector<8x128xf32>
    %168 = vector.shape_cast %165 : vector<8x128xf32> to vector<1x8x128xf32>
    tpu.vector_store %arg10[%c1_164, %c0_165, %c0_166], %168 {strides = array<i32>} : memref<2x8x128xf32, #tpu.memory_space<vmem>>, vector<1x8x128xf32>,
    return
  }
  func.func @transform_0(%arg0: i32) -> (i32, i32, i32, i32) {
    %c0_i32 = arith.constant 0 : i32
    %c0_i32_0 = arith.constant 0 : i32
    %c0_i32_1 = arith.constant 0 : i32
    %c0_i32_2 = arith.constant 0 : i32
    return %arg0, %c0_i32, %c0_i32_0, %c0_i32_1 : i32, i32, i32, i32
  }
  func.func @transform_1(%arg0: i32) -> (i32, i32, i32) {
    %c0_i32 = arith.constant 0 : i32
    %c0_i32_0 = arith.constant 0 : i32
    %c0_i32_1 = arith.constant 0 : i32
    %c0_i32_2 = arith.constant 0 : i32
    return %c0_i32, %c0_i32_0, %c0_i32_1 : i32, i32, i32
  }
  func.func @transform_2(%arg0: i32) -> (i32, i32) {
    %c0_i32 = arith.constant 0 : i32
    %c0_i32_0 = arith.constant 0 : i32
    %c0_i32_1 = arith.constant 0 : i32
    return %c0_i32, %c0_i32_0 : i32, i32
  }
  func.func @transform_3(%arg0: i32) -> (i32, i32) {
    %c0_i32 = arith.constant 0 : i32
    %c0_i32_0 = arith.constant 0 : i32
    %c0_i32_1 = arith.constant 0 : i32
    return %c0_i32, %c0_i32_0 : i32, i32
  }
  func.func @transform_4(%arg0: i32) -> (i32, i32) {
    %c0_i32 = arith.constant 0 : i32
    %c0_i32_0 = arith.constant 0 : i32
    %c0_i32_1 = arith.constant 0 : i32
    return %c0_i32, %c0_i32_0 : i32, i32
  }
  func.func @transform_5(%arg0: i32) -> (i32, i32) {
    %c0_i32 = arith.constant 0 : i32
    %c0_i32_0 = arith.constant 0 : i32
    %c0_i32_1 = arith.constant 0 : i32
    return %c0_i32, %c0_i32_0 : i32, i32
  }
  func.func @transform_6(%arg0: i32) -> (i32, i32) {
    %c0_i32 = arith.constant 0 : i32
    %c0_i32_0 = arith.constant 0 : i32
    %c0_i32_1 = arith.constant 0 : i32
    return %c0_i32, %c0_i32_0 : i32, i32
  }
  func.func @transform_7(%arg0: i32) -> (i32, i32) {
    %c0_i32 = arith.constant 0 : i32
    %c0_i32_0 = arith.constant 0 : i32
    %c0_i32_1 = arith.constant 0 : i32
    return %c0_i32, %c0_i32_0 : i32, i32
  }
  func.func @transform_8(%arg0: i32) -> (i32, i32) {
    %c0_i32 = arith.constant 0 : i32
    %c0_i32_0 = arith.constant 0 : i32
    %c0_i32_1 = arith.constant 0 : i32
    return %c0_i32, %c0_i32_0 : i32, i32
  }
  func.func @transform_9(%arg0: i32) -> (i32, i32, i32) {
    %c0_i32 = arith.constant 0 : i32
    %c0_i32_0 = arith.constant 0 : i32
    %c0_i32_1 = arith.constant 0 : i32
    return %arg0, %c0_i32, %c0_i32_0 : i32, i32, i32
  }
}

</mosaic_0001>

<llo_original>
// kernel: tpu_custom_call.1
$region0: #{tpu_custom_call.1}
  #allocation0 [shape = 'u32[]', space=smem, size = 0x4, offset = 0x4, fixed_abs, tag = 'smem constant byte address 0x4 - core index']
  #allocation1 [shape = 'u32[144,128]{1,0:T(1,128)}', space=vmem, size = 0x12000, scoped, tag = 'internal scratch']
  #allocation2 [shape = 'f32[24,256]{1,0:T(8,128)}', space=vmem, size = 0x6000, scoped, tag = 'scratch operand']
  #allocation3 [shape = 'f32[2,8,130]{2,1,0:T(8,128)}', space=vmem, size = 0x4000, scoped, tag = 'scratch operand']
  %s0 = inlined_call_operand.hbm [shape: f32[8,2,8,129], index: 0, kind: input, shape index: {}]
  %s1 = inlined_call_operand.vmem [shape: f32[2,1,129], index: 1, kind: input, shape index: {}]
  %s2 = inlined_call_operand.vmem [shape: f32[8,1], index: 2, kind: input, shape index: {}]
  %s3 = inlined_call_operand.vmem [shape: f32[8,1], index: 3, kind: input, shape index: {}]
  %s4 = inlined_call_operand.vmem [shape: f32[8,24], index: 4, kind: input, shape index: {}]
  %s5 = inlined_call_operand.vmem [shape: f32[8,1], index: 5, kind: input, shape index: {}]
  %s6 = inlined_call_operand.vmem [shape: f32[8,1], index: 6, kind: input, shape index: {}]
  %s7 = inlined_call_operand.vmem [shape: f32[8,24], index: 7, kind: input, shape index: {}]
  %s8 = inlined_call_operand.vmem [shape: f32[8,1], index: 8, kind: input, shape index: {}]
  %s9 = inlined_call_operand.hbm [shape: f32[8,8,128], index: 9, kind: output, shape index: {}]
  %s10 = sld [smem:[#allocation0]]
  $region73: #{tpu_custom_call.1} parent=0
    _
  %s12 = ssub.s32 1, %s10
  %s13 = scalar_select 0, %s12, %s10
  $region1: #{tpu_custom_call.1} parent=0
    #allocation4 [shape = 'u8[65536]{0}', space=vmem, size = 0x10000, scoped, tag = 'input window, operand 0']
    #allocation5 [shape = 's32[2]{0}', space=sflag, size = 0x8, scoped, tag = 'scoped memory for tpu_custom_call.1']
    #allocation6 [shape = 's32[2]{0}', space=sflag, size = 0x8, scoped, tag = 'scoped memory for tpu_custom_call.1']
    #allocation7 [shape = 'u8[16384]{0}', space=vmem, size = 0x4000, scoped, tag = 'output window, operand 0']
    %14 = vsyncpa [#allocation5], 0
    %s15 = scalar_lea.sflag [#allocation5], 1
    %16 = vsyncpa %s15, 0
    %17 = vsyncpa [#allocation6], 0
    %s18 = scalar_lea.sflag [#allocation6], 1
    %19 = vsyncpa %s18, 0
    loop: start=0, step=1, limit=6
    $region2: #{tpu_custom_call.1} parent=1 // loop_pre_header
      _
    $region3: #{tpu_custom_call.1} parent=1 // loop_header
      %s21 = sphi 0, %s25
      %p22 = scmp.ge.s32.totalorder %s21, 6
      %s31 = sphi 0, %s33
      %s34 = sphi 0, %s31
      %s35 = sphi 0, %s34
      %s51 = sphi 0, %s35
      %s55 = sphi 0, %s55
      %s57 = sphi 0, %s55
      %s58 = sphi 0, %s57
      %s72 = sphi 0, %s58
      %s76 = sphi 0, %s76
      %s78 = sphi 0, %s76
      %s79 = sphi 0, %s78
      %s93 = sphi 0, %s79
      %s97 = sphi 0, %s97
      %s99 = sphi 0, %s97
      %s100 = sphi 0, %s99
      %s114 = sphi 0, %s100
      %s118 = sphi 0, %s118
      %s120 = sphi 0, %s118
      %s121 = sphi 0, %s120
      %s135 = sphi 0, %s121
      %s139 = sphi 0, %s139
      %s141 = sphi 0, %s139
      %s142 = sphi 0, %s141
      %s156 = sphi 0, %s142
      %s160 = sphi 0, %s160
      %s162 = sphi 0, %s160
      %s163 = sphi 0, %s162
      %s177 = sphi 0, %s163
      %s181 = sphi 0, %s181
      %s183 = sphi 0, %s181
      %s184 = sphi 0, %s183
      %s198 = sphi 0, %s184
      %s202 = sphi 0, %s202
      %s204 = sphi 0, %s202
      %s205 = sphi 0, %s204
      %s219 = sphi 0, %s205
      %s225 = sphi 0, %s227
      %s228 = sphi 0, %s225
      %s229 = sphi 0, %s228
      %s245 = sphi 0, %s229
    $region4: #{tpu_custom_call.1} parent=1 // loop_header_branch
      %24 = sbr.rel (%p22) target = $region8
    $region5: #{tpu_custom_call.1} parent=1 // loop_body
      %s26 = ssub.s32 %s21, 1
      %s27 = ssub.s32 %s21, 2
      %s28 = sadd.s32 %s21, 1
      %s29 = ssub.s32 %s21, %s28
      %p30 = scmp.eq.s32.totalorder %s29, 0
      %s32 = sadd.s32 %s31, 1
      %s33 = scalar_select %p30, %s31, %s32
      %p36 = pneg %p30
      %p37 = scmp.eq.s32.totalorder %s21, 3
      %p38 = por %p36, %p37
      %p39 = scmp.ne.s32.totalorder %s31, %s34
      %p40 = scmp.eq.s32.totalorder %s21, 0
      %p41 = por %p39, %p40
      %p42 = scmp.ne.s32.totalorder %s31, %s34
      %p43 = scmp.eq.s32.totalorder %s26, 3
      %p44 = por %p42, %p43
      %p45 = scmp.ne.s32.totalorder %s34, %s35
      %p46 = scmp.eq.s32.totalorder %s26, 0
      %p47 = por %p45, %p46
      %p48 = scmp.ne.s32.totalorder %s34, %s35
      %p49 = scmp.eq.s32.totalorder %s27, 3
      %p50 = por %p48, %p49
      %p52 = scmp.ne.s32.totalorder %s35, %s51
      %p53 = scmp.eq.s32.totalorder %s27, 0
      %p54 = por %p52, %p53
      %s56 = sadd.s32 %s55, 1
      %p59 = scmp.eq.s32.totalorder %s21, 3
      %p60 = scmp.ne.s32.totalorder %s55, %s57
      %p61 = scmp.eq.s32.totalorder %s21, 0
      %p62 = por %p60, %p61
      %p63 = scmp.ne.s32.totalorder %s55, %s57
      %p64 = scmp.eq.s32.totalorder %s26, 3
      %p65 = por %p63, %p64
      %p66 = scmp.ne.s32.totalorder %s57, %s58
      %p67 = scmp.eq.s32.totalorder %s26, 0
      %p68 = por %p66, %p67
      %p69 = scmp.ne.s32.totalorder %s57, %s58
      %p70 = scmp.eq.s32.totalorder %s27, 3
      %p71 = por %p69, %p70
      %p73 = scmp.ne.s32.totalorder %s58, %s72
      %p74 = scmp.eq.s32.totalorder %s27, 0
      %p75 = por %p73, %p74
      %s77 = sadd.s32 %s76, 1
      %p80 = scmp.eq.s32.totalorder %s21, 3
      %p81 = scmp.ne.s32.totalorder %s76, %s78
      %p82 = scmp.eq.s32.totalorder %s21, 0
      %p83 = por %p81, %p82
      %p84 = scmp.ne.s32.totalorder %s76, %s78
      %p85 = scmp.eq.s32.totalorder %s26, 3
      %p86 = por %p84, %p85
      %p87 = scmp.ne.s32.totalorder %s78, %s79
      %p88 = scmp.eq.s32.totalorder %s26, 0
      %p89 = por %p87, %p88
      %p90 = scmp.ne.s32.totalorder %s78, %s79
      %p91 = scmp.eq.s32.totalorder %s27, 3
      %p92 = por %p90, %p91
      %p94 = scmp.ne.s32.totalorder %s79, %s93
      %p95 = scmp.eq.s32.totalorder %s27, 0
      %p96 = por %p94, %p95
      %s98 = sadd.s32 %s97, 1
      %p101 = scmp.eq.s32.totalorder %s21, 3
      %p102 = scmp.ne.s32.totalorder %s97, %s99
      %p103 = scmp.eq.s32.totalorder %s21, 0
      %p104 = por %p102, %p103
      %p105 = scmp.ne.s32.totalorder %s97, %s99
      %p106 = scmp.eq.s32.totalorder %s26, 3
      %p107 = por %p105, %p106
      %p108 = scmp.ne.s32.totalorder %s99, %s100
      %p109 = scmp.eq.s32.totalorder %s26, 0
      %p110 = por %p108, %p109
      %p111 = scmp.ne.s32.totalorder %s99, %s100
      %p112 = scmp.eq.s32.totalorder %s27, 3
      %p113 = por %p111, %p112
      %p115 = scmp.ne.s32.totalorder %s100, %s114
      %p116 = scmp.eq.s32.totalorder %s27, 0
      %p117 = por %p115, %p116
      %s119 = sadd.s32 %s118, 1
      %p122 = scmp.eq.s32.totalorder %s21, 3
      %p123 = scmp.ne.s32.totalorder %s118, %s120
      %p124 = scmp.eq.s32.totalorder %s21, 0
      %p125 = por %p123, %p124
      %p126 = scmp.ne.s32.totalorder %s118, %s120
      %p127 = scmp.eq.s32.totalorder %s26, 3
      %p128 = por %p126, %p127
      %p129 = scmp.ne.s32.totalorder %s120, %s121
      %p130 = scmp.eq.s32.totalorder %s26, 0
      %p131 = por %p129, %p130
      %p132 = scmp.ne.s32.totalorder %s120, %s121
      %p133 = scmp.eq.s32.totalorder %s27, 3
      %p134 = por %p132, %p133
      %p136 = scmp.ne.s32.totalorder %s121, %s135
      %p137 = scmp.eq.s32.totalorder %s27, 0
      %p138 = por %p136, %p137
      %s140 = sadd.s32 %s139, 1
      %p143 = scmp.eq.s32.totalorder %s21, 3
      %p144 = scmp.ne.s32.totalorder %s139, %s141
      %p145 = scmp.eq.s32.totalorder %s21, 0
      %p146 = por %p144, %p145
      %p147 = scmp.ne.s32.totalorder %s139, %s141
      %p148 = scmp.eq.s32.totalorder %s26, 3
      %p149 = por %p147, %p148
      %p150 = scmp.ne.s32.totalorder %s141, %s142
      %p151 = scmp.eq.s32.totalorder %s26, 0
      %p152 = por %p150, %p151
      %p153 = scmp.ne.s32.totalorder %s141, %s142
      %p154 = scmp.eq.s32.totalorder %s27, 3
      %p155 = por %p153, %p154
      %p157 = scmp.ne.s32.totalorder %s142, %s156
      %p158 = scmp.eq.s32.totalorder %s27, 0
      %p159 = por %p157, %p158
      %s161 = sadd.s32 %s160, 1
      %p164 = scmp.eq.s32.totalorder %s21, 3
      %p165 = scmp.ne.s32.totalorder %s160, %s162
      %p166 = scmp.eq.s32.totalorder %s21, 0
      %p167 = por %p165, %p166
      %p168 = scmp.ne.s32.totalorder %s160, %s162
      %p169 = scmp.eq.s32.totalorder %s26, 3
      %p170 = por %p168, %p169
      %p171 = scmp.ne.s32.totalorder %s162, %s163
      %p172 = scmp.eq.s32.totalorder %s26, 0
      %p173 = por %p171, %p172
      %p174 = scmp.ne.s32.totalorder %s162, %s163
      %p175 = scmp.eq.s32.totalorder %s27, 3
      %p176 = por %p174, %p175
      %p178 = scmp.ne.s32.totalorder %s163, %s177
      %p179 = scmp.eq.s32.totalorder %s27, 0
      %p180 = por %p178, %p179
      %s182 = sadd.s32 %s181, 1
      %p185 = scmp.eq.s32.totalorder %s21, 3
      %p186 = scmp.ne.s32.totalorder %s181, %s183
      %p187 = scmp.eq.s32.totalorder %s21, 0
      %p188 = por %p186, %p187
      %p189 = scmp.ne.s32.totalorder %s181, %s183
      %p190 = scmp.eq.s32.totalorder %s26, 3
      %p191 = por %p189, %p190
      %p192 = scmp.ne.s32.totalorder %s183, %s184
      %p193 = scmp.eq.s32.totalorder %s26, 0
      %p194 = por %p192, %p193
      %p195 = scmp.ne.s32.totalorder %s183, %s184
      %p196 = scmp.eq.s32.totalorder %s27, 3
      %p197 = por %p195, %p196
      %p199 = scmp.ne.s32.totalorder %s184, %s198
      %p200 = scmp.eq.s32.totalorder %s27, 0
      %p201 = por %p199, %p200
      %s203 = sadd.s32 %s202, 1
      %p206 = scmp.eq.s32.totalorder %s21, 3
      %p207 = scmp.ne.s32.totalorder %s202, %s204
      %p208 = scmp.eq.s32.totalorder %s21, 0
      %p209 = por %p207, %p208
      %p210 = scmp.ne.s32.totalorder %s202, %s204
      %p211 = scmp.eq.s32.totalorder %s26, 3
      %p212 = por %p210, %p211
      %p213 = scmp.ne.s32.totalorder %s204, %s205
      %p214 = scmp.eq.s32.totalorder %s26, 0
      %p215 = por %p213, %p214
      %p216 = scmp.ne.s32.totalorder %s204, %s205
      %p217 = scmp.eq.s32.totalorder %s27, 3
      %p218 = por %p216, %p217
      %p220 = scmp.ne.s32.totalorder %s205, %s219
      %p221 = scmp.eq.s32.totalorder %s27, 0
      %p222 = por %p220, %p221
      %s223 = ssub.s32 %s21, %s28
      %p224 = scmp.eq.s32.totalorder %s223, 0
      %s226 = sadd.s32 %s225, 1
      %s227 = scalar_select %p224, %s225, %s226
      %p230 = pneg %p224
      %p231 = scmp.eq.s32.totalorder %s21, 3
      %p232 = por %p230, %p231
      %p233 = scmp.ne.s32.totalorder %s225, %s228
      %p234 = scmp.eq.s32.totalorder %s21, 0
      %p235 = por %p233, %p234
      %p236 = scmp.ne.s32.totalorder %s225, %s228
      %p237 = scmp.eq.s32.totalorder %s26, 3
      %p238 = por %p236, %p237
      %p239 = scmp.ne.s32.totalorder %s228, %s229
      %p240 = scmp.eq.s32.totalorder %s26, 0
      %p241 = por %p239, %p240
      %p242 = scmp.ne.s32.totalorder %s228, %s229
      %p243 = scmp.eq.s32.totalorder %s27, 3
      %p244 = por %p242, %p243
      %p246 = scmp.ne.s32.totalorder %s229, %s245
      %p247 = scmp.eq.s32.totalorder %s27, 0
      %p248 = por %p246, %p247
      %p249 = scmp.le.s32.totalorder 1, %s21
      %p250 = scmp.lt.s32.totalorder %s21, 5
      %p251 = pnand %p249, %p250
      %p252 = pneg %p251
      // Predicated region
      $region9: #{tpu_custom_call.1} parent=5 // pred_check
        _
      $region10: #{tpu_custom_call.1} parent=5 // pred_check_branch
        %254 = sbr.rel (%p251) target = $region12
      $region11: #{tpu_custom_call.1} parent=5 // pred_region
        %s255 = ssub.s32 %s21, 1
        // Predicated region
        $region13: #{tpu_custom_call.1} parent=11 // pred_check
          %p256 = pneg %p68
        $region14: #{tpu_custom_call.1} parent=11 // pred_check_branch
          %258 = sbr.rel (%p256) target = $region16
        $region15: #{tpu_custom_call.1} parent=11 // pred_region
          _
        $region16: #{tpu_custom_call.1} parent=11 // pred_fallthru
          _
        // Predicated region
        $region17: #{tpu_custom_call.1} parent=11 // pred_check
          %p259 = pneg %p89
        $region18: #{tpu_custom_call.1} parent=11 // pred_check_branch
          %261 = sbr.rel (%p259) target = $region20
        $region19: #{tpu_custom_call.1} parent=11 // pred_region
          _
        $region20: #{tpu_custom_call.1} parent=11 // pred_fallthru
          _
        // Predicated region
        $region21: #{tpu_custom_call.1} parent=11 // pred_check
          %p262 = pneg %p110
        $region22: #{tpu_custom_call.1} parent=11 // pred_check_branch
          %264 = sbr.rel (%p262) target = $region24
        $region23: #{tpu_custom_call.1} parent=11 // pred_region
          _
        $region24: #{tpu_custom_call.1} parent=11 // pred_fallthru
          _
        // Predicated region
        $region25: #{tpu_custom_call.1} parent=11 // pred_check
          %p265 = pneg %p131
        $region26: #{tpu_custom_call.1} parent=11 // pred_check_branch
          %267 = sbr.rel (%p265) target = $region28
        $region27: #{tpu_custom_call.1} parent=11 // pred_region
          _
        $region28: #{tpu_custom_call.1} parent=11 // pred_fallthru
          _
        // Predicated region
        $region29: #{tpu_custom_call.1} parent=11 // pred_check
          %p268 = pneg %p152
        $region30: #{tpu_custom_call.1} parent=11 // pred_check_branch
          %270 = sbr.rel (%p268) target = $region32
        $region31: #{tpu_custom_call.1} parent=11 // pred_region
          _
        $region32: #{tpu_custom_call.1} parent=11 // pred_fallthru
          _
        // Predicated region
        $region33: #{tpu_custom_call.1} parent=11 // pred_check
          %p271 = pneg %p173
        $region34: #{tpu_custom_call.1} parent=11 // pred_check_branch
          %273 = sbr.rel (%p271) target = $region36
        $region35: #{tpu_custom_call.1} parent=11 // pred_region
          _
        $region36: #{tpu_custom_call.1} parent=11 // pred_fallthru
          _
        // Predicated region
        $region37: #{tpu_custom_call.1} parent=11 // pred_check
          %p274 = pneg %p194
        $region38: #{tpu_custom_call.1} parent=11 // pred_check_branch
          %276 = sbr.rel (%p274) target = $region40
        $region39: #{tpu_custom_call.1} parent=11 // pred_region
          _
        $region40: #{tpu_custom_call.1} parent=11 // pred_fallthru
          _
        // Predicated region
        $region41: #{tpu_custom_call.1} parent=11 // pred_check
          %p277 = pneg %p215
        $region42: #{tpu_custom_call.1} parent=11 // pred_check_branch
          %279 = sbr.rel (%p277) target = $region44
        $region43: #{tpu_custom_call.1} parent=11 // pred_region
          _
        $region44: #{tpu_custom_call.1} parent=11 // pred_fallthru
          _
      $region12: #{tpu_custom_call.1} parent=5 // pred_fallthru
        _
      %p280 = scmp.lt.s32.totalorder %s21, 4
      // Predicated region
      $region45: #{tpu_custom_call.1} parent=5 // pred_check
        %p281 = pneg %p280
      $region46: #{tpu_custom_call.1} parent=5 // pred_check_branch
        %283 = sbr.rel (%p281) target = $region48
      $region47: #{tpu_custom_call.1} parent=5 // pred_region
        // Predicated region
        $region49: #{tpu_custom_call.1} parent=47 // pred_check
          %p284 = pneg %p41
        $region50: #{tpu_custom_call.1} parent=47 // pred_check_branch
          %286 = sbr.rel (%p284) target = $region52
        $region51: #{tpu_custom_call.1} parent=47 // pred_region
          %s287 = sand.u32 %s31, 1
          %s288 = scalar_lea.sflag [#allocation5], %s287
          %s289 = sand.u32 %s31, 1
          %s290 = smul.addr %s289, 64
          %s291 = scalar_lea.vmem [#allocation4], %s290
          %s292 = smul.u32 2, %s21
          %s294 = ssub.s32 1024, 1024
          %295 = vsyncadd %s288, %s294
          %s296 = smul.addr %s292, 4
          %s297 = smul.addr %s296, 128
          %s298 = scalar_lea.hbm %s0, %s297
          %s299 = sshll.u32 %s291, 4
          %s300 = int_to_ptr.vmem [resolvable:$true] %s299
          %305 = dma.hbm_to_vmem [thread:$0]  %s298, 1024, %s300, %s288, 256, 256, 16
        $region52: #{tpu_custom_call.1} parent=47 // pred_fallthru
          _
      $region48: #{tpu_custom_call.1} parent=5 // pred_fallthru
        _
      %p306 = scmp.le.s32.totalorder 1, %s21
      %p307 = scmp.lt.s32.totalorder %s21, 5
      %p308 = pnand %p306, %p307
      %p309 = pneg %p308
      // Predicated region
      $region53: #{tpu_custom_call.1} parent=5 // pred_check
        _
      $region54: #{tpu_custom_call.1} parent=5 // pred_check_branch
        %311 = sbr.rel (%p308) target = $region56
      $region55: #{tpu_custom_call.1} parent=5 // pred_region
        %s312 = ssub.s32 %s21, 1
        %s313 = sand.u32 %s34, 1
        %s314 = scalar_lea.sflag [#allocation5], %s313
        %s315 = sand.u32 %s34, 1
        %s316 = smul.addr %s315, 64
        %s317 = scalar_lea.vmem [#allocation4], %s316
        // Predicated region
        $region57: #{tpu_custom_call.1} parent=55 // pred_check
          %p318 = pneg %p47
        $region58: #{tpu_custom_call.1} parent=55 // pred_check_branch
          %320 = sbr.rel (%p318) target = $region60
        $region59: #{tpu_custom_call.1} parent=55 // pred_region
          %321 = dma.done %s314, 1024
        $region60: #{tpu_custom_call.1} parent=55 // pred_fallthru
          _
        %s322 = sand.u32 %s34, 1
        %s323 = scalar_lea.sflag [#allocation5], %s322
        %s324 = sand.u32 %s34, 1
        %s325 = smul.addr %s324, 64
        %s326 = scalar_lea.vmem [#allocation4], %s325
        %p327 = pneg %p47
        %p328 = pneg %p44
        %p329 = pneg %p68
        %p330 = pneg %p65
        %p331 = pneg %p89
        %p332 = pneg %p86
        %p333 = pneg %p110
        %p334 = pneg %p107
        %p335 = pneg %p131
        %p336 = pneg %p128
        %p337 = pneg %p152
        %p338 = pneg %p149
        %p339 = pneg %p173
        %p340 = pneg %p170
        %p341 = pneg %p194
        %p342 = pneg %p191
        %p343 = pneg %p215
        %p344 = pneg %p212
        %p345 = pneg %p241
        %p346 = pneg %p238
        %s347 = sand.u32 %s228, 1
        %s348 = scalar_lea.sflag [#allocation6], %s347
        %s349 = sand.u32 %s228, 1
        %s350 = smul.addr %s349, 16
        %s351 = scalar_lea.vmem [#allocation7], %s350
        %s352 = smul.u32 2, %s26
        %s353 = smul.u32 2, %s26
        %v354 = vld [vmem:[%s317] sm:$0xff]
        %v355 = vld [vmem:[%s2] sm:$0xff]
        %357 = vset.pattern.permute.xlu0 0
        %358 = vperm.xlu0 %357, %v355
        %v359 = vpop.permute.xlu0 %358
        %v361 = vmul.f32 %v354, %v359
        %v362 = vld [vmem:[%s3] sm:$0xff]
        %364 = vset.pattern.permute.xlu0 0
        %365 = vperm.xlu0 %364, %v362
        %v366 = vpop.permute.xlu0 %365
        %v368 = vadd.f32 %v361, %v366
        %v369 = vmax.f32 %v368, 0.0
        %v370 = vld [vmem:[%s1] sm:$0x1]
        %v372 = vlaneseq
        %v373 = vshrl.u32 %v372, 7
        %v374 = vsub.s32 0, %v373
        %v375 = vrot.slane %v370, %v374
        %v377 = vmul.f32 %v369, %v375
        %378 = vst [vmem:[#allocation2] sm:$0xff] %v377
        %s379 = scalar_lea.vmem %s317, 16 [#allocation4]
        %v380 = vld [vmem:[%s379] sm:$0xff]
        %v381 = vld [vmem:[%s2] sm:$0xff]
        %383 = vset.pattern.permute.xlu0 0
        %384 = vperm.xlu0 %383, %v381
        %v385 = vpop.permute.xlu0 %384
        %v387 = vmul.f32 %v380, %v385
        %v388 = vld [vmem:[%s3] sm:$0xff]
        %390 = vset.pattern.permute.xlu0 0
        %391 = vperm.xlu0 %390, %v388
        %v392 = vpop.permute.xlu0 %391
        %v394 = vadd.f32 %v387, %v392
        %v395 = vmax.f32 %v394, 0.0
        %s396 = scalar_lea.vmem %s1, 2
        %v397 = vld [vmem:[%s396] sm:$0x1]
        %v399 = vlaneseq
        %v400 = vshrl.u32 %v399, 7
        %v401 = vsub.s32 0, %v400
        %v402 = vrot.slane %v397, %v401
        %v404 = vmul.f32 %v395, %v402
        %405 = vst [vmem:[#allocation2 + $0x10] sm:$0xff] %v404
        %v406 = vld [vmem:[%s317] sm:$0xff]
        %v407 = vld [vmem:[%s317 + $0x8] sm:$0xff]
        %v408 = vld [vmem:[%s2] sm:$0xff]
        %410 = vset.pattern.permute.xlu0 0
        %411 = vperm.xlu0 %410, %v408
        %v412 = vpop.permute.xlu0 %411
        %v414 = vmul.f32 %v406, %v412
        %v415 = vmul.f32 %v407, %v412
        %v416 = vld [vmem:[%s3] sm:$0xff]
        %418 = vset.pattern.permute.xlu0 0
        %419 = vperm.xlu0 %418, %v416
        %v420 = vpop.permute.xlu0 %419
        %v422 = vadd.f32 %v414, %v420
        %v423 = vadd.f32 %v415, %v420
        %v424 = vmax.f32 %v422, 0.0
        %v425 = vmax.f32 %v423, 0.0
        %v426 = vld [vmem:[%s1] sm:$0x3]
        %v428 = vlaneseq
        %v429 = vshrl.u32 %v428, 7
        %v430 = vsub.s32 0, %v429
        %v431 = vrot.slane %v426, %v430
        %v432 = vlaneseq
        %v433 = vshrl.u32 %v432, 7
        %v434 = vsub.s32 1, %v433
        %v435 = vrot.slane %v426, %v434
        %v438 = vmul.f32 %v424, %v431
        %v439 = vmul.f32 %v425, %v435
        %442 = vrot.lane.b32.xlu0 %v438, 127
        %v443 = vpop.permute.xlu0 %442
        %444 = vrot.lane.b32.xlu0 %v439, 127
        %v445 = vpop.permute.xlu0 %444
        %vm446 = vcmask 1039360
        %v447 = vsel %vm446, %v443, %v445
        %449 = vst [vmem:[#allocation2 + $0x20] sm:$0xff] %v447
        %s450 = scalar_lea.vmem %s317, 32 [#allocation4]
        %v451 = vld [vmem:[%s450] sm:$0xff]
        %v452 = vld [vmem:[%s2] sm:$0xff]
        %454 = vset.pattern.permute.xlu0 0
        %455 = vperm.xlu0 %454, %v452
        %v456 = vpop.permute.xlu0 %455
        %v458 = vmul.f32 %v451, %v456
        %v459 = vld [vmem:[%s3] sm:$0xff]
        %461 = vset.pattern.permute.xlu0 0
        %462 = vperm.xlu0 %461, %v459
        %v463 = vpop.permute.xlu0 %462
        %v465 = vadd.f32 %v458, %v463
        %v466 = vmax.f32 %v465, 0.0
        %v467 = vld [vmem:[%s1] sm:$0x1]
        %v469 = vlaneseq
        %v470 = vshrl.u32 %v469, 7
        %v471 = vsub.s32 0, %v470
        %v472 = vrot.slane %v467, %v471
        %v474 = vmul.f32 %v466, %v472
        %475 = vst [vmem:[#allocation2 + $0x8] sm:$0xff] %v474
        %s476 = scalar_lea.vmem %s317, 48 [#allocation4]
        %v477 = vld [vmem:[%s476] sm:$0xff]
        %v478 = vld [vmem:[%s2] sm:$0xff]
        %480 = vset.pattern.permute.xlu0 0
        %481 = vperm.xlu0 %480, %v478
        %v482 = vpop.permute.xlu0 %481
        %v484 = vmul.f32 %v477, %v482
        %v485 = vld [vmem:[%s3] sm:$0xff]
        %487 = vset.pattern.permute.xlu0 0
        %488 = vperm.xlu0 %487, %v485
        %v489 = vpop.permute.xlu0 %488
        %v491 = vadd.f32 %v484, %v489
        %v492 = vmax.f32 %v491, 0.0
        %v493 = vld [vmem:[%s396] sm:$0x1]
        %v495 = vlaneseq
        %v496 = vshrl.u32 %v495, 7
        %v497 = vsub.s32 0, %v496
        %v498 = vrot.slane %v493, %v497
        %v500 = vmul.f32 %v492, %v498
        %501 = vst [vmem:[#allocation2 + $0x18] sm:$0xff] %v500
        %v502 = vld [vmem:[%s450] sm:$0xff]
        %v503 = vld [vmem:[%s450 + $0x8] sm:$0xff]
        %v504 = vld [vmem:[%s2] sm:$0xff]
        %506 = vset.pattern.permute.xlu0 0
        %507 = vperm.xlu0 %506, %v504
        %v508 = vpop.permute.xlu0 %507
        %v510 = vmul.f32 %v502, %v508
        %v511 = vmul.f32 %v503, %v508
        %v512 = vld [vmem:[%s3] sm:$0xff]
        %514 = vset.pattern.permute.xlu0 0
        %515 = vperm.xlu0 %514, %v512
        %v516 = vpop.permute.xlu0 %515
        %v518 = vadd.f32 %v510, %v516
        %v519 = vadd.f32 %v511, %v516
        %v520 = vmax.f32 %v518, 0.0
        %v521 = vmax.f32 %v519, 0.0
        %v522 = vld [vmem:[%s1] sm:$0x3]
        %v524 = vlaneseq
        %v525 = vshrl.u32 %v524, 7
        %v526 = vsub.s32 0, %v525
        %v527 = vrot.slane %v522, %v526
        %v528 = vlaneseq
        %v529 = vshrl.u32 %v528, 7
        %v530 = vsub.s32 1, %v529
        %v531 = vrot.slane %v522, %v530
        %v534 = vmul.f32 %v520, %v527
        %v535 = vmul.f32 %v521, %v531
        %538 = vrot.lane.b32.xlu0 %v534, 127
        %v539 = vpop.permute.xlu0 %538
        %540 = vrot.lane.b32.xlu0 %v535, 127
        %v541 = vpop.permute.xlu0 %540
        %v542 = vsel %vm446, %v539, %v541
        %544 = vst [vmem:[#allocation2 + $0x28] sm:$0xff] %v542
        %v545 = vld [vmem:[%s4] sm:$0xff]
        %v546 = vld [vmem:[#allocation2] sm:$0xff]
        %v547 = vld [vmem:[#allocation2 + $0x8] sm:$0xff]
        %v548 = vld [vmem:[#allocation2 + $0x10] sm:$0xff]
        %v549 = vld [vmem:[#allocation2 + $0x18] sm:$0xff]
        %v550 = vld [vmem:[#allocation2 + $0x20] sm:$0xff]
        %v551 = vld [vmem:[#allocation2 + $0x28] sm:$0xff]
        %vm552 = vcmask 195584
        %v554 = vsel %vm552, %v545, 0
        %556 = vmatprep.subr.mxu0 0.0
        %557 = vmatpush1.msra.mxu0 0.0
        %558 = vmatprep.subr.mxu0 0.0
        %559 = vmatpush1.msra.mxu0 0.0
        %560 = vmatprep.subr.mxu0 0.0
        %561 = vmatpush1.msra.mxu0 0.0
        %562 = vmatprep.subr.mxu0 0.0
        %563 = vmatpush1.msra.mxu0 0.0
        %564 = vmatprep.subr.mxu0 0.0
        %565 = vmatpush1.msra.mxu0 0.0
        %566 = vmatprep.subr.mxu0 0.0
        %567 = vmatpush1.msra.mxu0 0.0
        %568 = vmatprep.subr.mxu0 0.0
        %569 = vmatpush1.msra.mxu0 0.0
        %570 = vmatprep.subr.mxu0 0.0
        %571 = vmatpush1.msra.mxu0 0.0
        %572 = vmatprep.subr.mxu0 0.0
        %573 = vmatpush1.msra.mxu0 0.0
        %574 = vmatprep.subr.mxu0 0.0
        %575 = vmatpush1.msra.mxu0 0.0
        %576 = vmatprep.subr.mxu0 0.0
        %577 = vmatpush1.msra.mxu0 0.0
        %578 = vmatprep.subr.mxu0 0.0
        %579 = vmatpush1.msra.mxu0 0.0
        %580 = vmatprep.subr.mxu0 0.0
        %581 = vmatpush1.msra.mxu0 0.0
        %582 = vmatprep.subr.mxu0 %v551
        %583 = vmatpush1.msra.mxu0 %v550
        %584 = vmatprep.subr.mxu0 %v549
        %585 = vmatpush1.msra.mxu0 %v548
        %586 = vmatprep.subr.mxu0 %v547
        %587 = vmatpush1.msra.mxu0 %v546
        %588 = vmatprep.subr.mxu0 0.0
        %589 = vmatpush2.msra.mxu0 0.0
        %590 = vmatprep.subr.mxu0 0.0
        %591 = vmatpush2.msra.mxu0 0.0
        %592 = vmatprep.subr.mxu0 0.0
        %593 = vmatpush2.msra.mxu0 0.0
        %594 = vmatprep.subr.mxu0 0.0
        %595 = vmatpush2.msra.mxu0 0.0
        %596 = vmatprep.subr.mxu0 0.0
        %597 = vmatpush2.msra.mxu0 0.0
        %598 = vmatprep.subr.mxu0 0.0
        %599 = vmatpush2.msra.mxu0 0.0
        %600 = vmatprep.subr.mxu0 0.0
        %601 = vmatpush2.msra.mxu0 0.0
        %602 = vmatprep.subr.mxu0 0.0
        %603 = vmatpush2.msra.mxu0 0.0
        %604 = vmatprep.subr.mxu0 0.0
        %605 = vmatpush2.msra.mxu0 0.0
        %606 = vmatprep.subr.mxu0 0.0
        %607 = vmatpush2.msra.mxu0 0.0
        %608 = vmatprep.subr.mxu0 0.0
        %609 = vmatpush2.msra.mxu0 0.0
        %610 = vmatprep.subr.mxu0 0.0
        %611 = vmatpush2.msra.mxu0 0.0
        %612 = vmatprep.subr.mxu0 0.0
        %613 = vmatpush2.msra.mxu0 0.0
        %614 = vmatprep.subr.mxu0 0.0
        %615 = vmatpush2.msra.mxu0 0.0
        %616 = vmatprep.subr.mxu0 0.0
        %617 = vmatpush2.msra.mxu0 0.0
        %618 = vmatprep.subr.mxu0 0.0
        %619 = vmatpush2.msra.mxu0 0.0
        %620 = vmatprep.mubr.f32.mxu0 0.0
        %621 = vmatmul.mubr.f32.gmra.mxu0 %v554
        %v622 = vpop.f32.mrf.mxu0
        %v623 = vadd.f32 0.0, %v622
        %v624 = vpop.f32.mrf.mxu0
        %v625 = vadd.f32 0.0, %v624
        %626 = vdwg.mxu0
        %v627 = vld [vmem:[%s5] sm:$0xff]
        %629 = vset.pattern.permute.xlu0 0
        %630 = vperm.xlu0 %629, %v627
        %v631 = vpop.permute.xlu0 %630
        %v633 = vmul.f32 %v623, %v631
        %v634 = vmul.f32 %v625, %v631
        %v635 = vld [vmem:[%s6] sm:$0xff]
        %637 = vset.pattern.permute.xlu0 0
        %638 = vperm.xlu0 %637, %v635
        %v639 = vpop.permute.xlu0 %638
        %v641 = vadd.f32 %v633, %v639
        %v642 = vadd.f32 %v634, %v639
        %v643 = vmax.f32 %v641, 0.0
        %v644 = vmax.f32 %v642, 0.0
        %vm645 = vcmask 7168
        %646 = vst.msk [vmem:[#allocation3] sm:$0xff] %vm645, 0.0
        %vm647 = vcmask 1047624
        %648 = vst.msk [vmem:[#allocation3] sm:$0xff] %vm647, 0.0
        %vm649 = vcmask 15360
        %650 = vst.msk [vmem:[#allocation3 + $0x8] sm:$0xff] %vm649, 0.0
        %652 = vrot.lane.b32.xlu0 %v643, 1
        %v653 = vpop.permute.xlu0 %652
        %vm655 = vcmask 72712
        %656 = vst.msk [vmem:[#allocation3] sm:$0xff] %vm655, %v653
        %s657 = scalar_lea.vmem [#allocation3], 16
        %658 = vst.msk [vmem:[%s657] sm:$0xff] %vm645, 0.0
        %659 = vst.msk [vmem:[%s657] sm:$0xff] %vm647, 0.0
        %660 = vst.msk [vmem:[%s657 + $0x8] sm:$0xff] %vm649, 0.0
        %662 = vrot.lane.b32.xlu0 %v644, 1
        %v663 = vpop.permute.xlu0 %662
        %665 = vst.msk [vmem:[%s657] sm:$0xff] %vm655, %v663
        %v666 = vld [vmem:[#allocation3] sm:$0xff]
        %667 = vst [vmem:[#allocation2] sm:$0xff] %v666
        %v668 = vld [vmem:[#allocation3] sm:$0xff]
        %v669 = vld [vmem:[#allocation3 + $0x8] sm:$0xff]
        %672 = vrot.lane.b32.xlu0 %v668, 127
        %v673 = vpop.permute.xlu0 %672
        %674 = vrot.lane.b32.xlu0 %v669, 127
        %v675 = vpop.permute.xlu0 %674
        %v676 = vsel %vm446, %v673, %v675
        %678 = vst [vmem:[#allocation2 + $0x10] sm:$0xff] %v676
        %v679 = vld [vmem:[#allocation3] sm:$0xff]
        %v680 = vld [vmem:[#allocation3 + $0x8] sm:$0xff]
        %683 = vrot.lane.b32.xlu0 %v679, 126
        %v684 = vpop.permute.xlu0 %683
        %685 = vrot.lane.b32.xlu0 %v680, 126
        %v686 = vpop.permute.xlu0 %685
        %vm687 = vcmask 1031168
        %v688 = vsel %vm687, %v684, %v686
        %690 = vst [vmem:[#allocation2 + $0x20] sm:$0xff] %v688
        %v691 = vld [vmem:[%s657] sm:$0xff]
        %692 = vst [vmem:[#allocation2 + $0x8] sm:$0xff] %v691
        %v693 = vld [vmem:[%s657] sm:$0xff]
        %v694 = vld [vmem:[%s657 + $0x8] sm:$0xff]
        %697 = vrot.lane.b32.xlu0 %v693, 127
        %v698 = vpop.permute.xlu0 %697
        %699 = vrot.lane.b32.xlu0 %v694, 127
        %v700 = vpop.permute.xlu0 %699
        %v701 = vsel %vm446, %v698, %v700
        %703 = vst [vmem:[#allocation2 + $0x18] sm:$0xff] %v701
        %v704 = vld [vmem:[%s657] sm:$0xff]
        %v705 = vld [vmem:[%s657 + $0x8] sm:$0xff]
        %708 = vrot.lane.b32.xlu0 %v704, 126
        %v709 = vpop.permute.xlu0 %708
        %710 = vrot.lane.b32.xlu0 %v705, 126
        %v711 = vpop.permute.xlu0 %710
        %v712 = vsel %vm687, %v709, %v711
        %714 = vst [vmem:[#allocation2 + $0x28] sm:$0xff] %v712
        %v715 = vld [vmem:[%s7] sm:$0xff]
        %v716 = vld [vmem:[#allocation2] sm:$0xff]
        %v717 = vld [vmem:[#allocation2 + $0x8] sm:$0xff]
        %v718 = vld [vmem:[#allocation2 + $0x10] sm:$0xff]
        %v719 = vld [vmem:[#allocation2 + $0x18] sm:$0xff]
        %v720 = vld [vmem:[#allocation2 + $0x20] sm:$0xff]
        %v721 = vld [vmem:[#allocation2 + $0x28] sm:$0xff]
        %v722 = vld [vmem:[%s8] sm:$0xff]
        %724 = vset.pattern.permute.xlu0 0
        %725 = vperm.xlu0 %724, %v722
        %v726 = vpop.permute.xlu0 %725
        %v729 = vsel %vm552, %v715, 0
        %731 = vmatprep.subr.mxu0 0.0
        %732 = vmatpush1.msra.mxu0 0.0
        %733 = vmatprep.subr.mxu0 0.0
        %734 = vmatpush1.msra.mxu0 0.0
        %735 = vmatprep.subr.mxu0 0.0
        %736 = vmatpush1.msra.mxu0 0.0
        %737 = vmatprep.subr.mxu0 0.0
        %738 = vmatpush1.msra.mxu0 0.0
        %739 = vmatprep.subr.mxu0 0.0
        %740 = vmatpush1.msra.mxu0 0.0
        %741 = vmatprep.subr.mxu0 0.0
        %742 = vmatpush1.msra.mxu0 0.0
        %743 = vmatprep.subr.mxu0 0.0
        %744 = vmatpush1.msra.mxu0 0.0
        %745 = vmatprep.subr.mxu0 0.0
        %746 = vmatpush1.msra.mxu0 0.0
        %747 = vmatprep.subr.mxu0 0.0
        %748 = vmatpush1.msra.mxu0 0.0
        %749 = vmatprep.subr.mxu0 0.0
        %750 = vmatpush1.msra.mxu0 0.0
        %751 = vmatprep.subr.mxu0 0.0
        %752 = vmatpush1.msra.mxu0 0.0
        %753 = vmatprep.subr.mxu0 0.0
        %754 = vmatpush1.msra.mxu0 0.0
        %755 = vmatprep.subr.mxu0 0.0
        %756 = vmatpush1.msra.mxu0 0.0
        %757 = vmatprep.subr.mxu0 %v721
        %758 = vmatpush1.msra.mxu0 %v720
        %759 = vmatprep.subr.mxu0 %v719
        %760 = vmatpush1.msra.mxu0 %v718
        %761 = vmatprep.subr.mxu0 %v717
        %762 = vmatpush1.msra.mxu0 %v716
        %763 = vmatprep.subr.mxu0 0.0
        %764 = vmatpush2.msra.mxu0 0.0
        %765 = vmatprep.subr.mxu0 0.0
        %766 = vmatpush2.msra.mxu0 0.0
        %767 = vmatprep.subr.mxu0 0.0
        %768 = vmatpush2.msra.mxu0 0.0
        %769 = vmatprep.subr.mxu0 0.0
        %770 = vmatpush2.msra.mxu0 0.0
        %771 = vmatprep.subr.mxu0 0.0
        %772 = vmatpush2.msra.mxu0 0.0
        %773 = vmatprep.subr.mxu0 0.0
        %774 = vmatpush2.msra.mxu0 0.0
        %775 = vmatprep.subr.mxu0 0.0
        %776 = vmatpush2.msra.mxu0 0.0
        %777 = vmatprep.subr.mxu0 0.0
        %778 = vmatpush2.msra.mxu0 0.0
        %779 = vmatprep.subr.mxu0 0.0
        %780 = vmatpush2.msra.mxu0 0.0
        %781 = vmatprep.subr.mxu0 0.0
        %782 = vmatpush2.msra.mxu0 0.0
        %783 = vmatprep.subr.mxu0 0.0
        %784 = vmatpush2.msra.mxu0 0.0
        %785 = vmatprep.subr.mxu0 0.0
        %786 = vmatpush2.msra.mxu0 0.0
        %787 = vmatprep.subr.mxu0 0.0
        %788 = vmatpush2.msra.mxu0 0.0
        %789 = vmatprep.subr.mxu0 0.0
        %790 = vmatpush2.msra.mxu0 0.0
        %791 = vmatprep.subr.mxu0 0.0
        %792 = vmatpush2.msra.mxu0 0.0
        %793 = vmatprep.subr.mxu0 0.0
        %794 = vmatpush2.msra.mxu0 0.0
        %795 = vmatprep.mubr.f32.mxu0 0.0
        %796 = vmatmul.mubr.f32.gmra.mxu0 %v729
        %v797 = vpop.f32.mrf.mxu0
        %v798 = vadd.f32 %v726, %v797
        %v799 = vpop.f32.mrf.mxu0
        %v800 = vadd.f32 %v726, %v799
        %801 = vdwg.mxu0
        %v802 = vld [vmem:[%s317] sm:$0xff]
        %v803 = vld [vmem:[%s379] sm:$0xff]
        %v804 = vmax.f32 %v802, %v803
        %v805 = vadd.f32 %v798, %v804
        %806 = vst [vmem:[%s351] sm:$0xff] %v805
        %v807 = vld [vmem:[%s450] sm:$0xff]
        %v808 = vld [vmem:[%s476] sm:$0xff]
        %v809 = vmax.f32 %v807, %v808
        %v810 = vadd.f32 %v800, %v809
        %s811 = scalar_lea.vmem %s351, 8 [#allocation7]
        %812 = vst [vmem:[%s811] sm:$0xff] %v810
        %s813 = sand.u32 %s228, 1
        %s814 = scalar_lea.sflag [#allocation6], %s813
        %s815 = sand.u32 %s228, 1
        %s816 = smul.addr %s815, 16
        %s817 = scalar_lea.vmem [#allocation7], %s816
        // Predicated region
        $region61: #{tpu_custom_call.1} parent=55 // pred_check
          %p818 = pneg %p238
        $region62: #{tpu_custom_call.1} parent=55 // pred_check_branch
          %820 = sbr.rel (%p818) target = $region64
        $region63: #{tpu_custom_call.1} parent=55 // pred_region
          %s821 = smul.u32 2, %s26
          %s823 = ssub.s32 256, 256
          %824 = vsyncadd %s814, %s823
          %s825 = smul.addr %s821, 128
          %s826 = scalar_lea.hbm %s9, %s825
          %s827 = sshll.u32 %s817, 4
          %s828 = int_to_ptr.vmem [resolvable:$true] %s827
          %833 = dma.vmem_to_hbm [thread:$0]  %s828, 256, %s826, %s814, 128, 128, 8
        $region64: #{tpu_custom_call.1} parent=55 // pred_fallthru
          _
      $region56: #{tpu_custom_call.1} parent=5 // pred_fallthru
        _
      %p834 = scmp.le.s32.totalorder 2, %s21
      // Predicated region
      $region65: #{tpu_custom_call.1} parent=5 // pred_check
        %p835 = pneg %p834
      $region66: #{tpu_custom_call.1} parent=5 // pred_check_branch
        %837 = sbr.rel (%p835) target = $region68
      $region67: #{tpu_custom_call.1} parent=5 // pred_region
        %s838 = ssub.s32 %s21, 2
        // Predicated region
        $region69: #{tpu_custom_call.1} parent=67 // pred_check
          %p839 = pneg %p244
        $region70: #{tpu_custom_call.1} parent=67 // pred_check_branch
          %841 = sbr.rel (%p839) target = $region72
        $region71: #{tpu_custom_call.1} parent=67 // pred_region
          %s842 = sand.u32 %s229, 1
          %s843 = scalar_lea.sflag [#allocation6], %s842
          %s844 = sand.u32 %s229, 1
          %s845 = smul.addr %s844, 16
          %s846 = scalar_lea.vmem [#allocation7], %s845
          %847 = dma.done %s843, 256
        $region72: #{tpu_custom_call.1} parent=67 // pred_fallthru
          _
      $region68: #{tpu_custom_call.1} parent=5 // pred_fallthru
        _
    $region6: #{tpu_custom_call.1} parent=1 // loop_footer
      %s25 = sadd.s32 1, %s21
    $region7: #{tpu_custom_call.1} parent=1 // loop_footer_branch
      %20 = sbr.rel target = $region3
    $region8: #{tpu_custom_call.1} parent=1 // loop_exit
      _
    %848 = vsyncpa [#allocation5], 1
    %s849 = scalar_lea.sflag [#allocation5], 1
    %850 = vsyncpa %s849, 1
    %851 = vsyncpa [#allocation6], 1
    %s852 = scalar_lea.sflag [#allocation6], 1
    %853 = vsyncpa %s852, 1

</llo_original>
